<compile_context>
chip_gen: v5e
topology: v5e:2x2
jax: 0.10.0
libtpu: 0.0.40
codegen_flags: <defaults>
</compile_context>

<pallas_src>
import functools
import math

import jax
import jax.numpy as jnp
from jax import lax
from jax.experimental import pallas as pl
from jax.experimental.pallas import tpu as pltpu

HIDDEN = 32  # LSTM hidden size


def _round_up(n, m):
    return ((n + m - 1) // m) * m


# ----------------------------------------------------------------------------
# Kernel
# ----------------------------------------------------------------------------
def _windfarm_kernel(
    x_ref,                                    # (TB, W*F) flat window block
    wbig_ref,                                 # (W*F, T*4H) subsample+wih0 folded
    b0_ref,                                   # (1, 4H)
    whh0_ref,                                 # (H, 4H)
    wl1_ref,                                  # (2H, 4H) = [wih1; whh1]
    b1_ref,                                   # (1, 4H)
    ln_g_ref, ln_b_ref,                       # LayerNorm affine (1, H)
    w1_ref, b1c_ref,                          # fused MLP layer 1: (feat,512),(1,512)
    w2_ref, b2c_ref,                          # block-diag layer 2: (512,64),(1,64)
    w3_ref, b3c_ref,                          # block-diag+pad layer 3: (64,128),(1,128)
    out_ref,                                  # (TB, 128) lane-dense packed output
    *, time_idx, n_features,
):
    H = HIDDEN
    H4 = 4 * H
    F = n_features
    T = len(time_idx)

    x = x_ref[...].astype(jnp.float32)        # (TB, W*F)
    TB = x.shape[0]

    # Per-timestep feature slices (lane slices of the flat block) for stats.
    xs = [x[:, t * F:(t + 1) * F] for t in time_idx]   # T x (TB, F)

    # ---- temporal statistics over the sub-sampled window (per feature) ----
    s = xs[0]
    mx = xs[0]
    mn = xs[0]
    for xt in xs[1:]:
        s = s + xt
        mx = jnp.maximum(mx, xt)
        mn = jnp.minimum(mn, xt)
    mean_f = s * (1.0 / T)
    sq = jnp.zeros_like(mean_f)
    for xt in xs:
        d = xt - mean_f
        sq = sq + d * d
    std_f = jnp.sqrt(sq * (1.0 / T))          # population std (unbiased=False)

    # ---- LSTM layer-0 input projection: the stride-5 subsample and wih0 are
    # folded into ONE matmul against a block-sparse (W*F, T*4H) weight; the
    # per-t gate slice below is a 128-lane-aligned vreg group.
    g0_all = jnp.dot(x, wbig_ref[...], preferred_element_type=jnp.float32)  # (TB, T*4H)

    whh0 = whh0_ref[...]
    wl1 = wl1_ref[...]
    b0_full = jnp.broadcast_to(b0_ref[...], (TB, H4))   # hoisted broadcasts
    b1_full = jnp.broadcast_to(b1_ref[...], (TB, H4))

    def cell(gates, c):
        # Full-width transcendentals: 2 EUP passes on (TB, 128) instead of
        # 4 masked 32-lane passes.  PyTorch gate order: i, f, g, o.
        sg = jax.nn.sigmoid(gates)
        tg = jnp.tanh(gates)
        i = sg[:, 0 * H:1 * H]
        f = sg[:, 1 * H:2 * H]
        g = tg[:, 2 * H:3 * H]
        o = sg[:, 3 * H:4 * H]
        c_new = f * c + i * g
        h_new = o * jnp.tanh(c_new)
        return h_new, c_new

    h0 = jnp.zeros((TB, H), jnp.float32)
    c0 = jnp.zeros((TB, H), jnp.float32)
    h1 = jnp.zeros((TB, H), jnp.float32)
    c1 = jnp.zeros((TB, H), jnp.float32)
    # T is tiny and static -> unroll at trace time.
    for k in range(T):
        g0 = (g0_all[:, k * H4:(k + 1) * H4] + b0_full
              + jnp.dot(h0, whh0, preferred_element_type=jnp.float32))
        h0, c0 = cell(g0, c0)
        # Fused layer-1 recurrence: one K=2H matmul instead of two K=H matmuls.
        h01 = jnp.concatenate([h0, h1], axis=1)            # (TB, 2H)
        g1 = jnp.dot(h01, wl1, preferred_element_type=jnp.float32) + b1_full
        h1, c1 = cell(g1, c1)

    # LayerNorm (eps = 1e-5) over the 32-dim LSTM feature.
    mu = jnp.mean(h1, axis=-1, keepdims=True)
    var = jnp.mean((h1 - mu) ** 2, axis=-1, keepdims=True)
    lstm_feat = (h1 - mu) * lax.rsqrt(var + 1e-5) * ln_g_ref[...] + ln_b_ref[...]

    feat = jnp.concatenate([lstm_feat, mean_f, std_f, mx, mn], axis=1)  # (TB, 32+4F)

    # Fused policy/value MLP (layer1 concatenated, layers 2/3 block-diagonal,
    # final layer zero-padded to 128 lanes -> one unmasked lane-dense store).
    z = jax.nn.relu(jnp.dot(feat, w1_ref[...], preferred_element_type=jnp.float32)
                    + b1c_ref[...])                       # (TB, 512) = [pol256 | val256]
    z = jax.nn.relu(jnp.dot(z, w2_ref[...], preferred_element_type=jnp.float32)
                    + b2c_ref[...])                       # (TB, 64)  = [pol32  | val32 ]
    z = jax.nn.relu(jnp.dot(z, w3_ref[...], preferred_element_type=jnp.float32)
                    + b3c_ref[...])                       # (TB, 128) = [pol16|val8|0...]
    out_ref[...] = z


KERNEL_PARAM_ORDER = [
    "wbig", "b0", "whh0", "wl1", "b1",
    "ln_g", "ln_b",
    "w1", "b1c", "w2", "b2c", "w3", "b3c",
]


# ----------------------------------------------------------------------------
# Parameter construction (PyTorch-equivalent layout, weights pre-transposed)
# ----------------------------------------------------------------------------
def init_params(key, n_features, window_size):
    H = HIDDEN
    if window_size >= 3:
        feature_dim = 32 + n_features * 4
    elif window_size > 1:
        feature_dim = n_features * 4
    else:
        feature_dim = n_features

    keys = iter(jax.random.split(key, 32))
    bound = 1.0 / math.sqrt(H)

    def u(kk, shape):  # PyTorch LSTM default init: U(-1/sqrt(H), 1/sqrt(H))
        return jax.random.uniform(kk, shape, jnp.float32, -bound, bound)

    w_ih0 = u(next(keys), (4 * H, n_features))
    w_hh0 = u(next(keys), (4 * H, H))
    b_ih0 = u(next(keys), (4 * H,))
    b_hh0 = u(next(keys), (4 * H,))
    w_ih1 = u(next(keys), (4 * H, H))
    w_hh1 = u(next(keys), (4 * H, H))
    b_ih1 = u(next(keys), (4 * H,))
    b_hh1 = u(next(keys), (4 * H,))

    def linear(kk, din, dout, gain):
        # PyTorch weight is (out, in), orthogonal init; store transposed (in, out).
        w = jax.nn.initializers.orthogonal(gain)(kk, (dout, din), jnp.float32)
        return w.T, jnp.zeros((1, dout), jnp.float32)

    g2 = math.sqrt(2.0)
    pw1, pb1 = linear(next(keys), feature_dim, 256, g2)
    pw2, pb2 = linear(next(keys), 256, 32, g2)
    pw3, pb3 = linear(next(keys), 32, 16, g2)
    vw1, vb1 = linear(next(keys), feature_dim, 256, 1.0)
    vw2, vb2 = linear(next(keys), 256, 32, 1.0)
    vw3, vb3 = linear(next(keys), 32, 8, 1.0)

    return dict(
        wih0=w_ih0.T, whh0=w_hh0.T, b0=(b_ih0 + b_hh0).reshape(1, 4 * H),
        wih1=w_ih1.T, whh1=w_hh1.T, b1=(b_ih1 + b_hh1).reshape(1, 4 * H),
        ln_g=jnp.ones((1, H), jnp.float32), ln_b=jnp.zeros((1, H), jnp.float32),
        pw1=pw1, pb1=pb1, pw2=pw2, pb2=pb2, pw3=pw3, pb3=pb3,
        vw1=vw1, vb1=vb1, vw2=vw2, vb2=vb2, vw3=vw3, vb3=vb3,
    )


def pack_params(p, *, n_features, window_size, step_interval=5):
    """Fuse weights into the kernel layout."""
    H = HIDDEN
    F, W = n_features, window_size
    time_idx = tuple(range(0, W, step_interval))

    # Fold the stride-`step_interval` subsample and the layer-0 input
    # projection into one block-sparse (W*F, T*4H) weight: column group k
    # reads only the F lanes of time step time_idx[k].
    wbig = jnp.zeros((W * F, len(time_idx) * 4 * H), jnp.float32)
    for k, t in enumerate(time_idx):
        wbig = wbig.at[t * F:(t + 1) * F, k * 4 * H:(k + 1) * 4 * H].set(p["wih0"])

    wl1 = jnp.concatenate([p["wih1"], p["whh1"]], axis=0)        # (2H, 4H)

    w1 = jnp.concatenate([p["pw1"], p["vw1"]], axis=1)           # (feat, 512)
    b1c = jnp.concatenate([p["pb1"], p["vb1"]], axis=1)          # (1, 512)

    w2 = jnp.zeros((512, 64), jnp.float32)
    w2 = w2.at[:256, :32].set(p["pw2"]).at[256:, 32:].set(p["vw2"])
    b2c = jnp.concatenate([p["pb2"], p["vb2"]], axis=1)          # (1, 64)

    w3 = jnp.zeros((64, 128), jnp.float32)                       # pad to 128 lanes
    w3 = w3.at[:32, :16].set(p["pw3"]).at[32:, 16:24].set(p["vw3"])
    b3c = jnp.zeros((1, 128), jnp.float32)
    b3c = b3c.at[:, :16].set(p["pb3"]).at[:, 16:24].set(p["vb3"])

    return dict(
        wbig=wbig, b0=p["b0"], whh0=p["whh0"], wl1=wl1, b1=p["b1"],
        ln_g=p["ln_g"], ln_b=p["ln_b"],
        w1=w1, b1c=b1c, w2=w2, b2c=b2c, w3=w3, b3c=b3c,
    )


# ----------------------------------------------------------------------------
# Wrapper
# ----------------------------------------------------------------------------
def windfarm_mlp_extractor(obs, packed, *, n_features, window_size,
                           step_interval=5, block_b=512):
    assert window_size >= 3, "kernel implements the window_size >= 3 path"
    B = obs.shape[0]
    W, F = window_size, n_features
    WF = W * F
    feat_dim = 32 + 4 * F

    # Lane-dense flat layout; the strided temporal subsample is folded into
    # the kernel's layer-0 projection weight (no separate gather pass).
    x = obs.reshape(B, WF).astype(jnp.float32)

    TB = min(block_b, _round_up(max(B, 1), 8))
    Bp = _round_up(B, TB)
    # v7x shards "parallel" grid axes over its 2 TensorCores: make sure the
    # grid has >= 2 steps whenever the batch is large enough to split.
    if Bp // TB == 1 and TB >= 16:
        TB = _round_up(TB // 2, 8)
        Bp = _round_up(B, TB)
    if Bp != B:
        x = jnp.pad(x, ((0, Bp - B), (0, 0)))

    time_idx = tuple(range(0, W, step_interval))
    T = len(time_idx)
    kernel = functools.partial(_windfarm_kernel, time_idx=time_idx,
                               n_features=F)

    param_list = [packed[k] for k in KERNEL_PARAM_ORDER]
    in_specs = [pl.BlockSpec((TB, WF), lambda i: (i, 0))]
    # Weights: full-array blocks with a constant index_map -> stay VMEM
    # resident across grid steps (no re-DMA).
    in_specs += [pl.BlockSpec(p.shape, lambda i: (0, 0)) for p in param_list]

    H4 = 4 * HIDDEN
    flops = 2 * Bp * (WF * T * H4                          # folded input proj
                      + T * (HIDDEN * H4 + 2 * HIDDEN * H4)  # recurrence
                      + feat_dim * 512 + 512 * 64 + 64 * 128)  # fused MLP
    transcendentals = Bp * (T * 2 * (2 * H4 + HIDDEN) + 8)
    bytes_accessed = 4 * (Bp * (WF + 128)
                          + sum(int(p.size) for p in param_list))

    out = pl.pallas_call(
        kernel,
        grid=(Bp // TB,),
        in_specs=in_specs,
        out_specs=pl.BlockSpec((TB, 128), lambda i: (i, 0)),
        out_shape=jax.ShapeDtypeStruct((Bp, 128), jnp.float32),
        compiler_params=pltpu.CompilerParams(
            dimension_semantics=("parallel",)),
        cost_estimate=pl.CostEstimate(
            flops=int(flops), transcendentals=int(transcendentals),
            bytes_accessed=int(bytes_accessed)),
    )(x, *param_list)

    pol = out[:B, :16]    # latent_dim_pi
    val = out[:B, 16:24]  # latent_dim_vf
    return pol, val


# ----------------------------------------------------------------------------
# Pure-JAX reference (mirrors the PyTorch module, eval mode) for verification
# ----------------------------------------------------------------------------
def _reference(obs, p, *, n_features, window_size, step_interval=5):
    H = HIDDEN
    B = obs.shape[0]
    x = obs.reshape(B, window_size, n_features)[:, ::step_interval, :]
    x = x.astype(jnp.float32)

    def cell(xt, h, c, wih, whh, b):
        gates = xt @ wih + h @ whh + b
        i = jax.nn.sigmoid(gates[:, :H])
        f = jax.nn.sigmoid(gates[:, H:2 * H])
        g = jnp.tanh(gates[:, 2 * H:3 * H])
        o = jax.nn.sigmoid(gates[:, 3 * H:])
        c = f * c + i * g
        return o * jnp.tanh(c), c

    h0 = c0 = h1 = c1 = jnp.zeros((B, H), jnp.float32)
    for t in range(x.shape[1]):
        h0, c0 = cell(x[:, t], h0, c0, p["wih0"], p["whh0"], p["b0"])
        h1, c1 = cell(h0, h1, c1, p["wih1"], p["whh1"], p["b1"])

    mu = h1.mean(-1, keepdims=True)
    var = ((h1 - mu) ** 2).mean(-1, keepdims=True)
    lf = (h1 - mu) * lax.rsqrt(var + 1e-5) * p["ln_g"] + p["ln_b"]

    mean_f = x.mean(1)
    std_f = jnp.sqrt(((x - mean_f[:, None, :]) ** 2).mean(1))
    feat = jnp.concatenate([lf, mean_f, std_f, x.max(1), x.min(1)], axis=1)

    def mlp(z, w1, b1, w2, b2, w3, b3):
        z = jax.nn.relu(z @ w1 + b1)
        z = jax.nn.relu(z @ w2 + b2)
        return jax.nn.relu(z @ w3 + b3)

    pol = mlp(feat, p["pw1"], p["pb1"], p["pw2"], p["pb2"], p["pw3"], p["pb3"])
    val = mlp(feat, p["vw1"], p["vb1"], p["vw2"], p["vb2"], p["vw3"], p["vb3"])
    return pol, val


if __name__ == "__main__":
    n_features = 4
    window_size = 15          # >= 3  -> feature_dim = 32 + 4*n_features = 48
    batch = 2

    key = jax.random.PRNGKey(0)
    k_params, k_obs = jax.random.split(key)
    params = init_params(k_params, n_features, window_size)
    packed = pack_params(params, n_features=n_features, window_size=window_size)
    obs = jax.random.normal(k_obs, (batch, window_size * n_features),
                            dtype=jnp.float32)

    pol, val = windfarm_mlp_extractor(
        obs, packed, n_features=n_features, window_size=window_size)
    jax.block_until_ready((pol, val))

    assert pol.shape == (batch, 16) and val.shape == (batch, 8)
    assert bool(jnp.all(jnp.isfinite(pol))) and bool(jnp.all(jnp.isfinite(val)))

    pol_ref, val_ref = _reference(
        obs, params, n_features=n_features, window_size=window_size)
    # 1e-3: allows for MXU default-precision / fused-matmul accumulation-order
    # differences between the kernel and the pure-JAX reference.
    assert bool(jnp.allclose(pol, pol_ref, atol=1e-3, rtol=1e-3))
    assert bool(jnp.allclose(val, val_ref, atol=1e-3, rtol=1e-3))

    print("KERNEL_OK")
</pallas_src>

<mosaic_0001>
module attributes {stable_mosaic.version = 11 : i64} {
  func.func @_windfarm_kernel(%arg0: i32, %arg1: memref<8x60xf32, #tpu.memory_space<vmem>>, %arg2: memref<60x384xf32, #tpu.memory_space<vmem>>, %arg3: memref<1x128xf32, #tpu.memory_space<vmem>>, %arg4: memref<32x128xf32, #tpu.memory_space<vmem>>, %arg5: memref<64x128xf32, #tpu.memory_space<vmem>>, %arg6: memref<1x128xf32, #tpu.memory_space<vmem>>, %arg7: memref<1x32xf32, #tpu.memory_space<vmem>>, %arg8: memref<1x32xf32, #tpu.memory_space<vmem>>, %arg9: memref<48x512xf32, #tpu.memory_space<vmem>>, %arg10: memref<1x512xf32, #tpu.memory_space<vmem>>, %arg11: memref<512x64xf32, #tpu.memory_space<vmem>>, %arg12: memref<1x64xf32, #tpu.memory_space<vmem>>, %arg13: memref<64x128xf32, #tpu.memory_space<vmem>>, %arg14: memref<1x128xf32, #tpu.memory_space<vmem>>, %arg15: memref<8x128xf32, #tpu.memory_space<vmem>>) attributes {dimension_semantics = [#tpu.dimension_semantics<parallel>], iteration_bounds = array<i64: 1>, scalar_prefetch = 0 : i64, scratch_operands = 0 : i64, tpu.core_type = #tpu.core_type<tc>, window_params = [{transform_indices = @transform_0, window_bounds = array<i64: 8, 60>}, {pipeline_mode = #tpu.pipeline_mode<synchronous>, transform_indices = @transform_1, window_bounds = array<i64: 60, 384>}, {pipeline_mode = #tpu.pipeline_mode<synchronous>, transform_indices = @transform_2, window_bounds = array<i64: 1, 128>}, {pipeline_mode = #tpu.pipeline_mode<synchronous>, transform_indices = @transform_3, window_bounds = array<i64: 32, 128>}, {pipeline_mode = #tpu.pipeline_mode<synchronous>, transform_indices = @transform_4, window_bounds = array<i64: 64, 128>}, {pipeline_mode = #tpu.pipeline_mode<synchronous>, transform_indices = @transform_5, window_bounds = array<i64: 1, 128>}, {pipeline_mode = #tpu.pipeline_mode<synchronous>, transform_indices = @transform_6, window_bounds = array<i64: 1, 32>}, {pipeline_mode = #tpu.pipeline_mode<synchronous>, transform_indices = @transform_7, window_bounds = array<i64: 1, 32>}, {pipeline_mode = #tpu.pipeline_mode<synchronous>, transform_indices = @transform_8, window_bounds = array<i64: 48, 512>}, {pipeline_mode = #tpu.pipeline_mode<synchronous>, transform_indices = @transform_9, window_bounds = array<i64: 1, 512>}, {pipeline_mode = #tpu.pipeline_mode<synchronous>, transform_indices = @transform_10, window_bounds = array<i64: 512, 64>}, {pipeline_mode = #tpu.pipeline_mode<synchronous>, transform_indices = @transform_11, window_bounds = array<i64: 1, 64>}, {pipeline_mode = #tpu.pipeline_mode<synchronous>, transform_indices = @transform_12, window_bounds = array<i64: 64, 128>}, {pipeline_mode = #tpu.pipeline_mode<synchronous>, transform_indices = @transform_13, window_bounds = array<i64: 1, 128>}, {transform_indices = @transform_14, window_bounds = array<i64: 8, 128>}]} {
    %c0 = arith.constant 0 : index
    %c0_0 = arith.constant 0 : index
    %0 = vector.load %arg1[%c0, %c0_0] : memref<8x60xf32, #tpu.memory_space<vmem>>, vector<8x60xf32>
    %1 = vector.extract_strided_slice %0 {offsets = [0, 0], sizes = [8, 4], strides = [1, 1]} : vector<8x60xf32> to vector<8x4xf32>
    %2 = vector.extract_strided_slice %0 {offsets = [0, 20], sizes = [8, 4], strides = [1, 1]} : vector<8x60xf32> to vector<8x4xf32>
    %3 = vector.extract_strided_slice %0 {offsets = [0, 40], sizes = [8, 4], strides = [1, 1]} : vector<8x60xf32> to vector<8x4xf32>
    %4 = arith.addf %1, %2 : vector<8x4xf32>
    %5 = arith.maximumf %1, %2 : vector<8x4xf32>
    %6 = arith.minimumf %1, %2 : vector<8x4xf32>
    %7 = arith.addf %4, %3 : vector<8x4xf32>
    %8 = arith.maximumf %5, %3 : vector<8x4xf32>
    %9 = arith.minimumf %6, %3 : vector<8x4xf32>
    %cst = arith.constant 0.333333343 : f32
    %10 = vector.broadcast %cst : f32 to vector<8x4xf32>
    %11 = arith.mulf %7, %10 : vector<8x4xf32>
    %cst_1 = arith.constant 0.000000e+00 : f32
    %12 = vector.broadcast %cst_1 : f32 to vector<8x4xf32>
    %13 = arith.subf %1, %11 : vector<8x4xf32>
    %14 = arith.mulf %13, %13 : vector<8x4xf32>
    %15 = arith.addf %12, %14 : vector<8x4xf32>
    %16 = arith.subf %2, %11 : vector<8x4xf32>
    %17 = arith.mulf %16, %16 : vector<8x4xf32>
    %18 = arith.addf %15, %17 : vector<8x4xf32>
    %19 = arith.subf %3, %11 : vector<8x4xf32>
    %20 = arith.mulf %19, %19 : vector<8x4xf32>
    %21 = arith.addf %18, %20 : vector<8x4xf32>
    %cst_2 = arith.constant 0.333333343 : f32
    %22 = vector.broadcast %cst_2 : f32 to vector<8x4xf32>
    %23 = arith.mulf %21, %22 : vector<8x4xf32>
    %24 = math.sqrt %23 : vector<8x4xf32>
    %c0_3 = arith.constant 0 : index
    %c0_4 = arith.constant 0 : index
    %25 = vector.load %arg2[%c0_3, %c0_4] : memref<60x384xf32, #tpu.memory_space<vmem>>, vector<60x384xf32>
    %cst_5 = arith.constant dense<0.000000e+00> : vector<8x384xf32>
    %26 = tpu.matmul %0, %25, %cst_5 {dimension_numbers = #tpu.dot_dimension_numbers<[1], [0], [0], [1], [0, 0, 1, 1], [], []>} : vector<8x60xf32>, vector<60x384xf32>, vector<8x384xf32> -> vector<8x384xf32>
    %c0_6 = arith.constant 0 : index
    %c0_7 = arith.constant 0 : index
    %27 = vector.load %arg4[%c0_6, %c0_7] : memref<32x128xf32, #tpu.memory_space<vmem>>, vector<32x128xf32>
    %c0_8 = arith.constant 0 : index
    %c0_9 = arith.constant 0 : index
    %28 = vector.load %arg5[%c0_8, %c0_9] : memref<64x128xf32, #tpu.memory_space<vmem>>, vector<64x128xf32>
    %c0_10 = arith.constant 0 : index
    %c0_11 = arith.constant 0 : index
    %29 = vector.load %arg3[%c0_10, %c0_11] : memref<1x128xf32, #tpu.memory_space<vmem>>, vector<1x128xf32>
    %30 = vector.shape_cast %29 : vector<1x128xf32> to vector<1x128xf32>
    %31 = vector.broadcast %30 : vector<1x128xf32> to vector<8x128xf32>
    %c0_12 = arith.constant 0 : index
    %c0_13 = arith.constant 0 : index
    %32 = vector.load %arg6[%c0_12, %c0_13] : memref<1x128xf32, #tpu.memory_space<vmem>>, vector<1x128xf32>
    %33 = vector.shape_cast %32 : vector<1x128xf32> to vector<1x128xf32>
    %34 = vector.broadcast %33 : vector<1x128xf32> to vector<8x128xf32>
    %cst_14 = arith.constant 0.000000e+00 : f32
    %35 = vector.broadcast %cst_14 : f32 to vector<8x32xf32>
    %cst_15 = arith.constant 0.000000e+00 : f32
    %36 = vector.broadcast %cst_15 : f32 to vector<8x32xf32>
    %cst_16 = arith.constant 0.000000e+00 : f32
    %37 = vector.broadcast %cst_16 : f32 to vector<8x32xf32>
    %cst_17 = arith.constant 0.000000e+00 : f32
    %38 = vector.broadcast %cst_17 : f32 to vector<8x32xf32>
    %39 = vector.extract_strided_slice %26 {offsets = [0, 0], sizes = [8, 128], strides = [1, 1]} : vector<8x384xf32> to vector<8x128xf32>
    %40 = arith.addf %39, %31 : vector<8x128xf32>
    %cst_18 = arith.constant dense<0.000000e+00> : vector<8x128xf32>
    %41 = tpu.matmul %35, %27, %cst_18 {dimension_numbers = #tpu.dot_dimension_numbers<[1], [0], [0], [1], [0, 0, 1, 1], [], []>} : vector<8x32xf32>, vector<32x128xf32>, vector<8x128xf32> -> vector<8x128xf32>
    %42 = arith.addf %40, %41 : vector<8x128xf32>
    %43 = arith.negf %42 : vector<8x128xf32>
    %44 = math.exp %43 : vector<8x128xf32>
    %cst_19 = arith.constant 1.000000e+00 : f32
    %45 = vector.broadcast %cst_19 : f32 to vector<8x128xf32>
    %46 = arith.addf %45, %44 : vector<8x128xf32>
    %47 = arith.divf %45, %46 : vector<8x128xf32>
    %48 = math.tanh %42 : vector<8x128xf32>
    %49 = vector.extract_strided_slice %47 {offsets = [0, 0], sizes = [8, 32], strides = [1, 1]} : vector<8x128xf32> to vector<8x32xf32>
    %50 = vector.extract_strided_slice %47 {offsets = [0, 32], sizes = [8, 32], strides = [1, 1]} : vector<8x128xf32> to vector<8x32xf32>
    %51 = vector.extract_strided_slice %48 {offsets = [0, 64], sizes = [8, 32], strides = [1, 1]} : vector<8x128xf32> to vector<8x32xf32>
    %52 = vector.extract_strided_slice %47 {offsets = [0, 96], sizes = [8, 32], strides = [1, 1]} : vector<8x128xf32> to vector<8x32xf32>
    %53 = arith.mulf %50, %36 : vector<8x32xf32>
    %54 = arith.mulf %49, %51 : vector<8x32xf32>
    %55 = arith.addf %53, %54 : vector<8x32xf32>
    %56 = math.tanh %55 : vector<8x32xf32>
    %57 = arith.mulf %52, %56 : vector<8x32xf32>
    %58 = tpu.concatenate %57, %37 in 1 : vector<8x32xf32>, vector<8x32xf32> -> vector<8x64xf32>
    %cst_20 = arith.constant dense<0.000000e+00> : vector<8x128xf32>
    %59 = tpu.matmul %58, %28, %cst_20 {dimension_numbers = #tpu.dot_dimension_numbers<[1], [0], [0], [1], [0, 0, 1, 1], [], []>} : vector<8x64xf32>, vector<64x128xf32>, vector<8x128xf32> -> vector<8x128xf32>
    %60 = arith.addf %59, %34 : vector<8x128xf32>
    %61 = arith.negf %60 : vector<8x128xf32>
    %62 = math.exp %61 : vector<8x128xf32>
    %cst_21 = arith.constant 1.000000e+00 : f32
    %63 = vector.broadcast %cst_21 : f32 to vector<8x128xf32>
    %64 = arith.addf %63, %62 : vector<8x128xf32>
    %65 = arith.divf %63, %64 : vector<8x128xf32>
    %66 = math.tanh %60 : vector<8x128xf32>
    %67 = vector.extract_strided_slice %65 {offsets = [0, 0], sizes = [8, 32], strides = [1, 1]} : vector<8x128xf32> to vector<8x32xf32>
    %68 = vector.extract_strided_slice %65 {offsets = [0, 32], sizes = [8, 32], strides = [1, 1]} : vector<8x128xf32> to vector<8x32xf32>
    %69 = vector.extract_strided_slice %66 {offsets = [0, 64], sizes = [8, 32], strides = [1, 1]} : vector<8x128xf32> to vector<8x32xf32>
    %70 = vector.extract_strided_slice %65 {offsets = [0, 96], sizes = [8, 32], strides = [1, 1]} : vector<8x128xf32> to vector<8x32xf32>
    %71 = arith.mulf %68, %38 : vector<8x32xf32>
    %72 = arith.mulf %67, %69 : vector<8x32xf32>
    %73 = arith.addf %71, %72 : vector<8x32xf32>
    %74 = math.tanh %73 : vector<8x32xf32>
    %75 = arith.mulf %70, %74 : vector<8x32xf32>
    %76 = vector.extract_strided_slice %26 {offsets = [0, 128], sizes = [8, 128], strides = [1, 1]} : vector<8x384xf32> to vector<8x128xf32>
    %77 = arith.addf %76, %31 : vector<8x128xf32>
    %cst_22 = arith.constant dense<0.000000e+00> : vector<8x128xf32>
    %78 = tpu.matmul %57, %27, %cst_22 {dimension_numbers = #tpu.dot_dimension_numbers<[1], [0], [0], [1], [0, 0, 1, 1], [], []>} : vector<8x32xf32>, vector<32x128xf32>, vector<8x128xf32> -> vector<8x128xf32>
    %79 = arith.addf %77, %78 : vector<8x128xf32>
    %80 = arith.negf %79 : vector<8x128xf32>
    %81 = math.exp %80 : vector<8x128xf32>
    %cst_23 = arith.constant 1.000000e+00 : f32
    %82 = vector.broadcast %cst_23 : f32 to vector<8x128xf32>
    %83 = arith.addf %82, %81 : vector<8x128xf32>
    %84 = arith.divf %82, %83 : vector<8x128xf32>
    %85 = math.tanh %79 : vector<8x128xf32>
    %86 = vector.extract_strided_slice %84 {offsets = [0, 0], sizes = [8, 32], strides = [1, 1]} : vector<8x128xf32> to vector<8x32xf32>
    %87 = vector.extract_strided_slice %84 {offsets = [0, 32], sizes = [8, 32], strides = [1, 1]} : vector<8x128xf32> to vector<8x32xf32>
    %88 = vector.extract_strided_slice %85 {offsets = [0, 64], sizes = [8, 32], strides = [1, 1]} : vector<8x128xf32> to vector<8x32xf32>
    %89 = vector.extract_strided_slice %84 {offsets = [0, 96], sizes = [8, 32], strides = [1, 1]} : vector<8x128xf32> to vector<8x32xf32>
    %90 = arith.mulf %87, %55 : vector<8x32xf32>
    %91 = arith.mulf %86, %88 : vector<8x32xf32>
    %92 = arith.addf %90, %91 : vector<8x32xf32>
    %93 = math.tanh %92 : vector<8x32xf32>
    %94 = arith.mulf %89, %93 : vector<8x32xf32>
    %95 = tpu.concatenate %94, %75 in 1 : vector<8x32xf32>, vector<8x32xf32> -> vector<8x64xf32>
    %cst_24 = arith.constant dense<0.000000e+00> : vector<8x128xf32>
    %96 = tpu.matmul %95, %28, %cst_24 {dimension_numbers = #tpu.dot_dimension_numbers<[1], [0], [0], [1], [0, 0, 1, 1], [], []>} : vector<8x64xf32>, vector<64x128xf32>, vector<8x128xf32> -> vector<8x128xf32>
    %97 = arith.addf %96, %34 : vector<8x128xf32>
    %98 = arith.negf %97 : vector<8x128xf32>
    %99 = math.exp %98 : vector<8x128xf32>
    %cst_25 = arith.constant 1.000000e+00 : f32
    %100 = vector.broadcast %cst_25 : f32 to vector<8x128xf32>
    %101 = arith.addf %100, %99 : vector<8x128xf32>
    %102 = arith.divf %100, %101 : vector<8x128xf32>
    %103 = math.tanh %97 : vector<8x128xf32>
    %104 = vector.extract_strided_slice %102 {offsets = [0, 0], sizes = [8, 32], strides = [1, 1]} : vector<8x128xf32> to vector<8x32xf32>
    %105 = vector.extract_strided_slice %102 {offsets = [0, 32], sizes = [8, 32], strides = [1, 1]} : vector<8x128xf32> to vector<8x32xf32>
    %106 = vector.extract_strided_slice %103 {offsets = [0, 64], sizes = [8, 32], strides = [1, 1]} : vector<8x128xf32> to vector<8x32xf32>
    %107 = vector.extract_strided_slice %102 {offsets = [0, 96], sizes = [8, 32], strides = [1, 1]} : vector<8x128xf32> to vector<8x32xf32>
    %108 = arith.mulf %105, %73 : vector<8x32xf32>
    %109 = arith.mulf %104, %106 : vector<8x32xf32>
    %110 = arith.addf %108, %109 : vector<8x32xf32>
    %111 = math.tanh %110 : vector<8x32xf32>
    %112 = arith.mulf %107, %111 : vector<8x32xf32>
    %113 = vector.extract_strided_slice %26 {offsets = [0, 256], sizes = [8, 128], strides = [1, 1]} : vector<8x384xf32> to vector<8x128xf32>
    %114 = arith.addf %113, %31 : vector<8x128xf32>
    %cst_26 = arith.constant dense<0.000000e+00> : vector<8x128xf32>
    %115 = tpu.matmul %94, %27, %cst_26 {dimension_numbers = #tpu.dot_dimension_numbers<[1], [0], [0], [1], [0, 0, 1, 1], [], []>} : vector<8x32xf32>, vector<32x128xf32>, vector<8x128xf32> -> vector<8x128xf32>
    %116 = arith.addf %114, %115 : vector<8x128xf32>
    %117 = arith.negf %116 : vector<8x128xf32>
    %118 = math.exp %117 : vector<8x128xf32>
    %cst_27 = arith.constant 1.000000e+00 : f32
    %119 = vector.broadcast %cst_27 : f32 to vector<8x128xf32>
    %120 = arith.addf %119, %118 : vector<8x128xf32>
    %121 = arith.divf %119, %120 : vector<8x128xf32>
    %122 = math.tanh %116 : vector<8x128xf32>
    %123 = vector.extract_strided_slice %121 {offsets = [0, 0], sizes = [8, 32], strides = [1, 1]} : vector<8x128xf32> to vector<8x32xf32>
    %124 = vector.extract_strided_slice %121 {offsets = [0, 32], sizes = [8, 32], strides = [1, 1]} : vector<8x128xf32> to vector<8x32xf32>
    %125 = vector.extract_strided_slice %122 {offsets = [0, 64], sizes = [8, 32], strides = [1, 1]} : vector<8x128xf32> to vector<8x32xf32>
    %126 = vector.extract_strided_slice %121 {offsets = [0, 96], sizes = [8, 32], strides = [1, 1]} : vector<8x128xf32> to vector<8x32xf32>
    %127 = arith.mulf %124, %92 : vector<8x32xf32>
    %128 = arith.mulf %123, %125 : vector<8x32xf32>
    %129 = arith.addf %127, %128 : vector<8x32xf32>
    %130 = math.tanh %129 : vector<8x32xf32>
    %131 = arith.mulf %126, %130 : vector<8x32xf32>
    %132 = tpu.concatenate %131, %112 in 1 : vector<8x32xf32>, vector<8x32xf32> -> vector<8x64xf32>
    %cst_28 = arith.constant dense<0.000000e+00> : vector<8x128xf32>
    %133 = tpu.matmul %132, %28, %cst_28 {dimension_numbers = #tpu.dot_dimension_numbers<[1], [0], [0], [1], [0, 0, 1, 1], [], []>} : vector<8x64xf32>, vector<64x128xf32>, vector<8x128xf32> -> vector<8x128xf32>
    %134 = arith.addf %133, %34 : vector<8x128xf32>
    %135 = arith.negf %134 : vector<8x128xf32>
    %136 = math.exp %135 : vector<8x128xf32>
    %cst_29 = arith.constant 1.000000e+00 : f32
    %137 = vector.broadcast %cst_29 : f32 to vector<8x128xf32>
    %138 = arith.addf %137, %136 : vector<8x128xf32>
    %139 = arith.divf %137, %138 : vector<8x128xf32>
    %140 = math.tanh %134 : vector<8x128xf32>
    %141 = vector.extract_strided_slice %139 {offsets = [0, 0], sizes = [8, 32], strides = [1, 1]} : vector<8x128xf32> to vector<8x32xf32>
    %142 = vector.extract_strided_slice %139 {offsets = [0, 32], sizes = [8, 32], strides = [1, 1]} : vector<8x128xf32> to vector<8x32xf32>
    %143 = vector.extract_strided_slice %140 {offsets = [0, 64], sizes = [8, 32], strides = [1, 1]} : vector<8x128xf32> to vector<8x32xf32>
    %144 = vector.extract_strided_slice %139 {offsets = [0, 96], sizes = [8, 32], strides = [1, 1]} : vector<8x128xf32> to vector<8x32xf32>
    %145 = arith.mulf %142, %110 : vector<8x32xf32>
    %146 = arith.mulf %141, %143 : vector<8x32xf32>
    %147 = arith.addf %145, %146 : vector<8x32xf32>
    %148 = math.tanh %147 : vector<8x32xf32>
    %149 = arith.mulf %144, %148 : vector<8x32xf32>
    %cst_30 = arith.constant dense<0.000000e+00> : vector<8xf32>
    %150 = vector.multi_reduction <add>, %149, %cst_30 [1] : vector<8x32xf32> to vector<8xf32>
    %151 = vector.shape_cast %150 : vector<8xf32> to vector<8x1xf32>
    %cst_31 = arith.constant 3.200000e+01 : f32
    %152 = vector.broadcast %cst_31 : f32 to vector<8x1xf32>
    %153 = arith.divf %151, %152 : vector<8x1xf32>
    %154 = vector.broadcast %153 : vector<8x1xf32> to vector<8x32xf32>
    %155 = arith.subf %149, %154 : vector<8x32xf32>
    %156 = arith.mulf %155, %155 : vector<8x32xf32>
    %cst_32 = arith.constant dense<0.000000e+00> : vector<8xf32>
    %157 = vector.multi_reduction <add>, %156, %cst_32 [1] : vector<8x32xf32> to vector<8xf32>
    %158 = vector.shape_cast %157 : vector<8xf32> to vector<8x1xf32>
    %cst_33 = arith.constant 3.200000e+01 : f32
    %159 = vector.broadcast %cst_33 : f32 to vector<8x1xf32>
    %160 = arith.divf %158, %159 : vector<8x1xf32>
    %161 = vector.broadcast %153 : vector<8x1xf32> to vector<8x32xf32>
    %162 = arith.subf %149, %161 : vector<8x32xf32>
    %cst_34 = arith.constant 9.99999974E-6 : f32
    %163 = vector.broadcast %cst_34 : f32 to vector<8x1xf32>
    %164 = arith.addf %160, %163 : vector<8x1xf32>
    %165 = math.rsqrt %164 : vector<8x1xf32>
    %166 = vector.broadcast %165 : vector<8x1xf32> to vector<8x32xf32>
    %167 = arith.mulf %162, %166 : vector<8x32xf32>
    %c0_35 = arith.constant 0 : index
    %c0_36 = arith.constant 0 : index
    %168 = vector.load %arg7[%c0_35, %c0_36] : memref<1x32xf32, #tpu.memory_space<vmem>>, vector<1x32xf32>
    %169 = vector.broadcast %168 : vector<1x32xf32> to vector<8x32xf32>
    %170 = arith.mulf %167, %169 : vector<8x32xf32>
    %c0_37 = arith.constant 0 : index
    %c0_38 = arith.constant 0 : index
    %171 = vector.load %arg8[%c0_37, %c0_38] : memref<1x32xf32, #tpu.memory_space<vmem>>, vector<1x32xf32>
    %172 = vector.broadcast %171 : vector<1x32xf32> to vector<8x32xf32>
    %173 = arith.addf %170, %172 : vector<8x32xf32>
    %174 = tpu.concatenate %173, %11, %24, %8, %9 in 1 : vector<8x32xf32>, vector<8x4xf32>, vector<8x4xf32>, vector<8x4xf32>, vector<8x4xf32> -> vector<8x48xf32>
    %c0_39 = arith.constant 0 : index
    %c0_40 = arith.constant 0 : index
    %175 = vector.load %arg9[%c0_39, %c0_40] : memref<48x512xf32, #tpu.memory_space<vmem>>, vector<48x512xf32>
    %cst_41 = arith.constant dense<0.000000e+00> : vector<8x512xf32>
    %176 = tpu.matmul %174, %175, %cst_41 {dimension_numbers = #tpu.dot_dimension_numbers<[1], [0], [0], [1], [0, 0, 1, 1], [], []>} : vector<8x48xf32>, vector<48x512xf32>, vector<8x512xf32> -> vector<8x512xf32>
    %c0_42 = arith.constant 0 : index
    %c0_43 = arith.constant 0 : index
    %177 = vector.load %arg10[%c0_42, %c0_43] : memref<1x512xf32, #tpu.memory_space<vmem>>, vector<1x512xf32>
    %178 = vector.broadcast %177 : vector<1x512xf32> to vector<8x512xf32>
    %179 = arith.addf %176, %178 : vector<8x512xf32>
    %cst_44 = arith.constant 0.000000e+00 : f32
    %180 = vector.broadcast %cst_44 : f32 to vector<8x512xf32>
    %181 = arith.maximumf %179, %180 : vector<8x512xf32>
    %c0_45 = arith.constant 0 : index
    %c0_46 = arith.constant 0 : index
    %182 = vector.load %arg11[%c0_45, %c0_46] : memref<512x64xf32, #tpu.memory_space<vmem>>, vector<512x64xf32>
    %cst_47 = arith.constant dense<0.000000e+00> : vector<8x64xf32>
    %183 = tpu.matmul %181, %182, %cst_47 {dimension_numbers = #tpu.dot_dimension_numbers<[1], [0], [0], [1], [0, 0, 1, 1], [], []>} : vector<8x512xf32>, vector<512x64xf32>, vector<8x64xf32> -> vector<8x64xf32>
    %c0_48 = arith.constant 0 : index
    %c0_49 = arith.constant 0 : index
    %184 = vector.load %arg12[%c0_48, %c0_49] : memref<1x64xf32, #tpu.memory_space<vmem>>, vector<1x64xf32>
    %185 = vector.broadcast %184 : vector<1x64xf32> to vector<8x64xf32>
    %186 = arith.addf %183, %185 : vector<8x64xf32>
    %cst_50 = arith.constant 0.000000e+00 : f32
    %187 = vector.broadcast %cst_50 : f32 to vector<8x64xf32>
    %188 = arith.maximumf %186, %187 : vector<8x64xf32>
    %c0_51 = arith.constant 0 : index
    %c0_52 = arith.constant 0 : index
    %189 = vector.load %arg13[%c0_51, %c0_52] : memref<64x128xf32, #tpu.memory_space<vmem>>, vector<64x128xf32>
    %cst_53 = arith.constant dense<0.000000e+00> : vector<8x128xf32>
    %190 = tpu.matmul %188, %189, %cst_53 {dimension_numbers = #tpu.dot_dimension_numbers<[1], [0], [0], [1], [0, 0, 1, 1], [], []>} : vector<8x64xf32>, vector<64x128xf32>, vector<8x128xf32> -> vector<8x128xf32>
    %c0_54 = arith.constant 0 : index
    %c0_55 = arith.constant 0 : index
    %191 = vector.load %arg14[%c0_54, %c0_55] : memref<1x128xf32, #tpu.memory_space<vmem>>, vector<1x128xf32>
    %192 = vector.broadcast %191 : vector<1x128xf32> to vector<8x128xf32>
    %193 = arith.addf %190, %192 : vector<8x128xf32>
    %cst_56 = arith.constant 0.000000e+00 : f32
    %194 = vector.broadcast %cst_56 : f32 to vector<8x128xf32>
    %195 = arith.maximumf %193, %194 : vector<8x128xf32>
    %c0_57 = arith.constant 0 : index
    %c0_58 = arith.constant 0 : index
    %196 = vector.load %arg15[%c0_57, %c0_58] : memref<8x128xf32, #tpu.memory_space<vmem>>, vector<8x128xf32>
    tpu.vector_store %arg15[%c0_57, %c0_58], %195 {strides = array<i32>} : memref<8x128xf32, #tpu.memory_space<vmem>>, vector<8x128xf32>,
    return
  }
  func.func @transform_0(%arg0: i32) -> (i32, i32) {
    %c0_i32 = arith.constant 0 : i32
    %c0_i32_0 = arith.constant 0 : i32
    return %arg0, %c0_i32 : i32, i32
  }
  func.func @transform_1(%arg0: i32) -> (i32, i32) {
    %c0_i32 = arith.constant 0 : i32
    %c0_i32_0 = arith.constant 0 : i32
    %c0_i32_1 = arith.constant 0 : i32
    return %c0_i32, %c0_i32_0 : i32, i32
  }
  func.func @transform_2(%arg0: i32) -> (i32, i32) {
    %c0_i32 = arith.constant 0 : i32
    %c0_i32_0 = arith.constant 0 : i32
    %c0_i32_1 = arith.constant 0 : i32
    return %c0_i32, %c0_i32_0 : i32, i32
  }
  func.func @transform_3(%arg0: i32) -> (i32, i32) {
    %c0_i32 = arith.constant 0 : i32
    %c0_i32_0 = arith.constant 0 : i32
    %c0_i32_1 = arith.constant 0 : i32
    return %c0_i32, %c0_i32_0 : i32, i32
  }
  func.func @transform_4(%arg0: i32) -> (i32, i32) {
    %c0_i32 = arith.constant 0 : i32
    %c0_i32_0 = arith.constant 0 : i32
    %c0_i32_1 = arith.constant 0 : i32
    return %c0_i32, %c0_i32_0 : i32, i32
  }
  func.func @transform_5(%arg0: i32) -> (i32, i32) {
    %c0_i32 = arith.constant 0 : i32
    %c0_i32_0 = arith.constant 0 : i32
    %c0_i32_1 = arith.constant 0 : i32
    return %c0_i32, %c0_i32_0 : i32, i32
  }
  func.func @transform_6(%arg0: i32) -> (i32, i32) {
    %c0_i32 = arith.constant 0 : i32
    %c0_i32_0 = arith.constant 0 : i32
    %c0_i32_1 = arith.constant 0 : i32
    return %c0_i32, %c0_i32_0 : i32, i32
  }
  func.func @transform_7(%arg0: i32) -> (i32, i32) {
    %c0_i32 = arith.constant 0 : i32
    %c0_i32_0 = arith.constant 0 : i32
    %c0_i32_1 = arith.constant 0 : i32
    return %c0_i32, %c0_i32_0 : i32, i32
  }
  func.func @transform_8(%arg0: i32) -> (i32, i32) {
    %c0_i32 = arith.constant 0 : i32
    %c0_i32_0 = arith.constant 0 : i32
    %c0_i32_1 = arith.constant 0 : i32
    return %c0_i32, %c0_i32_0 : i32, i32
  }
  func.func @transform_9(%arg0: i32) -> (i32, i32) {
    %c0_i32 = arith.constant 0 : i32
    %c0_i32_0 = arith.constant 0 : i32
    %c0_i32_1 = arith.constant 0 : i32
    return %c0_i32, %c0_i32_0 : i32, i32
  }
  func.func @transform_10(%arg0: i32) -> (i32, i32) {
    %c0_i32 = arith.constant 0 : i32
    %c0_i32_0 = arith.constant 0 : i32
    %c0_i32_1 = arith.constant 0 : i32
    return %c0_i32, %c0_i32_0 : i32, i32
  }
  func.func @transform_11(%arg0: i32) -> (i32, i32) {
    %c0_i32 = arith.constant 0 : i32
    %c0_i32_0 = arith.constant 0 : i32
    %c0_i32_1 = arith.constant 0 : i32
    return %c0_i32, %c0_i32_0 : i32, i32
  }
  func.func @transform_12(%arg0: i32) -> (i32, i32) {
    %c0_i32 = arith.constant 0 : i32
    %c0_i32_0 = arith.constant 0 : i32
    %c0_i32_1 = arith.constant 0 : i32
    return %c0_i32, %c0_i32_0 : i32, i32
  }
  func.func @transform_13(%arg0: i32) -> (i32, i32) {
    %c0_i32 = arith.constant 0 : i32
    %c0_i32_0 = arith.constant 0 : i32
    %c0_i32_1 = arith.constant 0 : i32
    return %c0_i32, %c0_i32_0 : i32, i32
  }
  func.func @transform_14(%arg0: i32) -> (i32, i32) {
    %c0_i32 = arith.constant 0 : i32
    %c0_i32_0 = arith.constant 0 : i32
    return %arg0, %c0_i32 : i32, i32
  }
}

</mosaic_0001>

<llo_original>
// kernel: tpu_custom_call.1
$region0: #{tpu_custom_call.1}
  #allocation0 [shape = 'u32[]', space=smem, size = 0x4, offset = 0x4, fixed_abs, tag = 'smem constant byte address 0x4 - core index']
  #allocation1 [shape = 'u32[72,128]{1,0:T(1,128)}', space=vmem, size = 0x9000, scoped, tag = 'internal scratch']
  %s0 = inlined_call_operand.vmem [shape: f32[8,60], index: 0, kind: input, shape index: {}]
  %s1 = inlined_call_operand.vmem [shape: f32[60,384], index: 1, kind: input, shape index: {}]
  %s2 = inlined_call_operand.vmem [shape: f32[1,128], index: 2, kind: input, shape index: {}]
  %s3 = inlined_call_operand.vmem [shape: f32[32,128], index: 3, kind: input, shape index: {}]
  %s4 = inlined_call_operand.vmem [shape: f32[64,128], index: 4, kind: input, shape index: {}]
  %s5 = inlined_call_operand.vmem [shape: f32[1,128], index: 5, kind: input, shape index: {}]
  %s6 = inlined_call_operand.vmem [shape: f32[1,32], index: 6, kind: input, shape index: {}]
  %s7 = inlined_call_operand.vmem [shape: f32[1,32], index: 7, kind: input, shape index: {}]
  %s8 = inlined_call_operand.vmem [shape: f32[48,512], index: 8, kind: input, shape index: {}]
  %s9 = inlined_call_operand.vmem [shape: f32[1,512], index: 9, kind: input, shape index: {}]
  %s10 = inlined_call_operand.vmem [shape: f32[512,64], index: 10, kind: input, shape index: {}]
  %s11 = inlined_call_operand.vmem [shape: f32[1,64], index: 11, kind: input, shape index: {}]
  %s12 = inlined_call_operand.vmem [shape: f32[64,128], index: 12, kind: input, shape index: {}]
  %s13 = inlined_call_operand.vmem [shape: f32[1,128], index: 13, kind: input, shape index: {}]
  %s14 = inlined_call_operand.hbm [shape: f32[8,128], index: 14, kind: output, shape index: {}]
  %s15 = sld [smem:[#allocation0]]
  $region66: #{tpu_custom_call.1} parent=0
    _
  %s17 = ssub.s32 1, %s15
  %s18 = scalar_select 0, %s17, %s15
  $region1: #{tpu_custom_call.1} parent=0
    #allocation2 [shape = 'u8[4096]{0}', space=vmem, size = 0x1000, scoped, tag = 'output window, operand 0, single buffered']
    #allocation3 [shape = 's32[1]{0}', space=sflag, size = 0x4, scoped, tag = 'scoped memory for tpu_custom_call.1']
    %19 = vsyncpa [#allocation3], 0
    // Predicated region
    $region2: #{tpu_custom_call.1} parent=1 // pred_check
      _
    $region3: #{tpu_custom_call.1} parent=1 // pred_check_branch
      %21 = sbr.rel (0) target = $region5
    $region4: #{tpu_custom_call.1} parent=1 // pred_region
      _
    $region5: #{tpu_custom_call.1} parent=1 // pred_fallthru
      _
    // Predicated region
    $region6: #{tpu_custom_call.1} parent=1 // pred_check
      _
    $region7: #{tpu_custom_call.1} parent=1 // pred_check_branch
      %23 = sbr.rel (0) target = $region9
    $region8: #{tpu_custom_call.1} parent=1 // pred_region
      _
    $region9: #{tpu_custom_call.1} parent=1 // pred_fallthru
      _
    // Predicated region
    $region10: #{tpu_custom_call.1} parent=1 // pred_check
      _
    $region11: #{tpu_custom_call.1} parent=1 // pred_check_branch
      %25 = sbr.rel (0) target = $region13
    $region12: #{tpu_custom_call.1} parent=1 // pred_region
      _
    $region13: #{tpu_custom_call.1} parent=1 // pred_fallthru
      _
    // Predicated region
    $region14: #{tpu_custom_call.1} parent=1 // pred_check
      _
    $region15: #{tpu_custom_call.1} parent=1 // pred_check_branch
      %27 = sbr.rel (0) target = $region17
    $region16: #{tpu_custom_call.1} parent=1 // pred_region
      _
    $region17: #{tpu_custom_call.1} parent=1 // pred_fallthru
      _
    // Predicated region
    $region18: #{tpu_custom_call.1} parent=1 // pred_check
      _
    $region19: #{tpu_custom_call.1} parent=1 // pred_check_branch
      %29 = sbr.rel (0) target = $region21
    $region20: #{tpu_custom_call.1} parent=1 // pred_region
      _
    $region21: #{tpu_custom_call.1} parent=1 // pred_fallthru
      _
    // Predicated region
    $region22: #{tpu_custom_call.1} parent=1 // pred_check
      _
    $region23: #{tpu_custom_call.1} parent=1 // pred_check_branch
      %31 = sbr.rel (0) target = $region25
    $region24: #{tpu_custom_call.1} parent=1 // pred_region
      _
    $region25: #{tpu_custom_call.1} parent=1 // pred_fallthru
      _
    // Predicated region
    $region26: #{tpu_custom_call.1} parent=1 // pred_check
      _
    $region27: #{tpu_custom_call.1} parent=1 // pred_check_branch
      %33 = sbr.rel (0) target = $region29
    $region28: #{tpu_custom_call.1} parent=1 // pred_region
      _
    $region29: #{tpu_custom_call.1} parent=1 // pred_fallthru
      _
    // Predicated region
    $region30: #{tpu_custom_call.1} parent=1 // pred_check
      _
    $region31: #{tpu_custom_call.1} parent=1 // pred_check_branch
      %35 = sbr.rel (0) target = $region33
    $region32: #{tpu_custom_call.1} parent=1 // pred_region
      _
    $region33: #{tpu_custom_call.1} parent=1 // pred_fallthru
      _
    // Predicated region
    $region34: #{tpu_custom_call.1} parent=1 // pred_check
      _
    $region35: #{tpu_custom_call.1} parent=1 // pred_check_branch
      %37 = sbr.rel (0) target = $region37
    $region36: #{tpu_custom_call.1} parent=1 // pred_region
      _
    $region37: #{tpu_custom_call.1} parent=1 // pred_fallthru
      _
    // Predicated region
    $region38: #{tpu_custom_call.1} parent=1 // pred_check
      _
    $region39: #{tpu_custom_call.1} parent=1 // pred_check_branch
      %39 = sbr.rel (0) target = $region41
    $region40: #{tpu_custom_call.1} parent=1 // pred_region
      _
    $region41: #{tpu_custom_call.1} parent=1 // pred_fallthru
      _
    // Predicated region
    $region42: #{tpu_custom_call.1} parent=1 // pred_check
      _
    $region43: #{tpu_custom_call.1} parent=1 // pred_check_branch
      %41 = sbr.rel (0) target = $region45
    $region44: #{tpu_custom_call.1} parent=1 // pred_region
      _
    $region45: #{tpu_custom_call.1} parent=1 // pred_fallthru
      _
    // Predicated region
    $region46: #{tpu_custom_call.1} parent=1 // pred_check
      _
    $region47: #{tpu_custom_call.1} parent=1 // pred_check_branch
      %43 = sbr.rel (0) target = $region49
    $region48: #{tpu_custom_call.1} parent=1 // pred_region
      _
    $region49: #{tpu_custom_call.1} parent=1 // pred_fallthru
      _
    // Predicated region
    $region50: #{tpu_custom_call.1} parent=1 // pred_check
      _
    $region51: #{tpu_custom_call.1} parent=1 // pred_check_branch
      %45 = sbr.rel (0) target = $region53
    $region52: #{tpu_custom_call.1} parent=1 // pred_region
      _
    $region53: #{tpu_custom_call.1} parent=1 // pred_fallthru
      _
    // Predicated region
    $region54: #{tpu_custom_call.1} parent=1 // pred_check
      _
    $region55: #{tpu_custom_call.1} parent=1 // pred_check_branch
      %47 = sbr.rel (0) target = $region57
    $region56: #{tpu_custom_call.1} parent=1 // pred_region
      _
    $region57: #{tpu_custom_call.1} parent=1 // pred_fallthru
      _
    %v48 = vld [vmem:[%s0] sm:$0xff]
    %50 = vrot.lane.b32.xlu0 %v48, 108
    %v51 = vpop.permute.xlu0 %50
    %v53 = vadd.f32 %v48, %v51
    %v54 = vmax.f32 %v48, %v51
    %v55 = vmin.f32 %v48, %v51
    %56 = vrot.lane.b32.xlu0 %v48, 88
    %v57 = vpop.permute.xlu0 %56
    %v59 = vadd.f32 %v53, %v57
    %v60 = vmax.f32 %v54, %v57
    %v61 = vmin.f32 %v55, %v57
    %v62 = vmul.f32 %v59, 0.33333334
    %v63 = vsub.f32 %v48, %v62
    %v64 = vmul.f32 %v63, %v63
    %v65 = vadd.f32 %v64, 0.0
    %67 = vrot.lane.b32.xlu0 %v62, 20
    %v68 = vpop.permute.xlu0 %67
    %v70 = vsub.f32 %v48, %v68
    %v71 = vmul.f32 %v70, %v70
    %73 = vrot.lane.b32.xlu0 %v71, 108
    %v74 = vpop.permute.xlu0 %73
    %v76 = vadd.f32 %v65, %v74
    %77 = vrot.lane.b32.xlu0 %v62, 40
    %v78 = vpop.permute.xlu0 %77
    %v80 = vsub.f32 %v48, %v78
    %v81 = vmul.f32 %v80, %v80
    %83 = vrot.lane.b32.xlu0 %v81, 88
    %v84 = vpop.permute.xlu0 %83
    %v86 = vadd.f32 %v76, %v84
    %v87 = vmul.f32 %v86, 0.33333334
    %v88 = vrsqrt.pop %v87
    %v89 = vmul.f32 %v88, %v87
    %v90 = vmul.f32 %v89, %v88
    %v91 = vmul.f32 0.5, %v90
    %v92 = vsub.f32 1.5, %v91
    %v93 = vmul.f32 %v88, %v92
    %v94 = vmul.f32 %v87, %v93
    %vm95 = vcmp.eq.f32.partialorder %v87, inf
    %v96 = vsel %vm95, %v87, %v94
    %vm97 = vcmp.eq.f32.partialorder %v87, 0.0
    %v98 = vand.u32 %v87, 2147483648
    %v99 = vsel %vm97, %v98, %v96
    %v100 = vld [vmem:[%s1] sm:$0xff]
    %v101 = vld [vmem:[%s1 + $0x8] sm:$0xff]
    %v102 = vld [vmem:[%s1 + $0x10] sm:$0xff]
    %v103 = vld [vmem:[%s1 + $0x18] sm:$0xff]
    %v104 = vld [vmem:[%s1 + $0x20] sm:$0xff]
    %v105 = vld [vmem:[%s1 + $0x28] sm:$0xff]
    %v106 = vld [vmem:[%s1 + $0x30] sm:$0xff]
    %v107 = vld [vmem:[%s1 + $0x38] sm:$0xff]
    %v108 = vld [vmem:[%s1 + $0x40] sm:$0xff]
    %v109 = vld [vmem:[%s1 + $0x48] sm:$0xff]
    %v110 = vld [vmem:[%s1 + $0x50] sm:$0xff]
    %v111 = vld [vmem:[%s1 + $0x58] sm:$0xff]
    %v112 = vld [vmem:[%s1 + $0x60] sm:$0xff]
    %v113 = vld [vmem:[%s1 + $0x68] sm:$0xff]
    %v114 = vld [vmem:[%s1 + $0x70] sm:$0xff]
    %v115 = vld [vmem:[%s1 + $0x78] sm:$0xff]
    %v116 = vld [vmem:[%s1 + $0x80] sm:$0xff]
    %v117 = vld [vmem:[%s1 + $0x88] sm:$0xff]
    %v118 = vld [vmem:[%s1 + $0x90] sm:$0xff]
    %v119 = vld [vmem:[%s1 + $0x98] sm:$0xff]
    %v120 = vld [vmem:[%s1 + $0xa0] sm:$0xff]
    %v121 = vld [vmem:[%s1 + $0xa8] sm:$0xf]
    %v122 = vld [vmem:[%s1 + $0xb0] sm:$0xf]
    %v123 = vld [vmem:[%s1 + $0xb8] sm:$0xf]
    %vm124 = vcmask 490496
    %v125 = vsel %vm124, %v48, 0
    %vm127 = vcmask 1043456
    %v129 = vsel %vm127, %v121, 0
    %v132 = vsel %vm127, %v122, 0
    %v135 = vsel %vm127, %v123, 0
    %137 = vmatpush.msra.mxu0 0.0
    %138 = vmatpush.msra.mxu0 0.0
    %139 = vmatpush.msra.mxu0 0.0
    %140 = vmatpush.msra.mxu0 0.0
    %141 = vmatpush.msra.mxu0 0.0
    %142 = vmatpush.msra.mxu0 0.0
    %143 = vmatpush.msra.mxu0 0.0
    %144 = vmatpush.msra.mxu0 0.0
    %145 = vmatpush.msra.mxu0 %v129
    %146 = vmatpush.msra.mxu0 %v118
    %147 = vmatpush.msra.mxu0 %v115
    %148 = vmatpush.msra.mxu0 %v112
    %149 = vmatpush.msra.mxu0 %v109
    %150 = vmatpush.msra.mxu0 %v106
    %151 = vmatpush.msra.mxu0 %v103
    %152 = vmatpush.msra.mxu0 %v100
    %153 = vmatmul.f32.gmra.mxu0 %v125
    %v154 = vpop.f32.mrf.mxu0
    %v155 = vadd.f32 0.0, %v154
    %156 = vdwg.mxu0
    %157 = vmatpush.msra.mxu0 0.0
    %158 = vmatpush.msra.mxu0 0.0
    %159 = vmatpush.msra.mxu0 0.0
    %160 = vmatpush.msra.mxu0 0.0
    %161 = vmatpush.msra.mxu0 0.0
    %162 = vmatpush.msra.mxu0 0.0
    %163 = vmatpush.msra.mxu0 0.0
    %164 = vmatpush.msra.mxu0 0.0
    %165 = vmatpush.msra.mxu0 %v132
    %166 = vmatpush.msra.mxu0 %v119
    %167 = vmatpush.msra.mxu0 %v116
    %168 = vmatpush.msra.mxu0 %v113
    %169 = vmatpush.msra.mxu0 %v110
    %170 = vmatpush.msra.mxu0 %v107
    %171 = vmatpush.msra.mxu0 %v104
    %172 = vmatpush.msra.mxu0 %v101
    %173 = vmatmul.f32.gmra.mxu0 %v125
    %v174 = vpop.f32.mrf.mxu0
    %v175 = vadd.f32 0.0, %v174
    %176 = vdwg.mxu0
    %177 = vmatpush.msra.mxu0 0.0
    %178 = vmatpush.msra.mxu0 0.0
    %179 = vmatpush.msra.mxu0 0.0
    %180 = vmatpush.msra.mxu0 0.0
    %181 = vmatpush.msra.mxu0 0.0
    %182 = vmatpush.msra.mxu0 0.0
    %183 = vmatpush.msra.mxu0 0.0
    %184 = vmatpush.msra.mxu0 0.0
    %185 = vmatpush.msra.mxu0 %v135
    %186 = vmatpush.msra.mxu0 %v120
    %187 = vmatpush.msra.mxu0 %v117
    %188 = vmatpush.msra.mxu0 %v114
    %189 = vmatpush.msra.mxu0 %v111
    %190 = vmatpush.msra.mxu0 %v108
    %191 = vmatpush.msra.mxu0 %v105
    %192 = vmatpush.msra.mxu0 %v102
    %193 = vmatmul.f32.gmra.mxu0 %v125
    %v194 = vpop.f32.mrf.mxu0
    %v195 = vadd.f32 0.0, %v194
    %196 = vdwg.mxu0
    %v197 = vld [vmem:[%s3] sm:$0xff]
    %v198 = vld [vmem:[%s3 + $0x8] sm:$0xff]
    %v199 = vld [vmem:[%s3 + $0x10] sm:$0xff]
    %v200 = vld [vmem:[%s3 + $0x18] sm:$0xff]
    %v201 = vld [vmem:[%s4] sm:$0xff]
    %v202 = vld [vmem:[%s4 + $0x8] sm:$0xff]
    %v203 = vld [vmem:[%s4 + $0x10] sm:$0xff]
    %v204 = vld [vmem:[%s4 + $0x18] sm:$0xff]
    %v205 = vld [vmem:[%s4 + $0x20] sm:$0xff]
    %v206 = vld [vmem:[%s4 + $0x28] sm:$0xff]
    %v207 = vld [vmem:[%s4 + $0x30] sm:$0xff]
    %v208 = vld [vmem:[%s4 + $0x38] sm:$0xff]
    %v209 = vld [vmem:[%s2] sm:$0x1]
    %v211 = vperm.slane %v209, 0
    %v213 = vld [vmem:[%s5] sm:$0x1]
    %v215 = vperm.slane %v213, 0
    %v217 = vadd.f32 %v155, %v211
    %vm218 = vcmask 261120
    %v220 = vsel %vm218, 0.0, 0
    %222 = vmatpush.msra.mxu0 0.0
    %223 = vmatpush.msra.mxu0 0.0
    %224 = vmatpush.msra.mxu0 0.0
    %225 = vmatpush.msra.mxu0 0.0
    %226 = vmatpush.msra.mxu0 0.0
    %227 = vmatpush.msra.mxu0 0.0
    %228 = vmatpush.msra.mxu0 0.0
    %229 = vmatpush.msra.mxu0 0.0
    %230 = vmatpush.msra.mxu0 0.0
    %231 = vmatpush.msra.mxu0 0.0
    %232 = vmatpush.msra.mxu0 0.0
    %233 = vmatpush.msra.mxu0 0.0
    %234 = vmatpush.msra.mxu0 %v200
    %235 = vmatpush.msra.mxu0 %v199
    %236 = vmatpush.msra.mxu0 %v198
    %237 = vmatpush.msra.mxu0 %v197
    %238 = vmatmul.f32.gmra.mxu0 %v220
    %v239 = vpop.f32.mrf.mxu0
    %v240 = vadd.f32 0.0, %v239
    %241 = vdwg.mxu0
    %v242 = vadd.f32 %v217, %v240
    %v243 = vxor.u32 %v242, 2147483648
    %v244 = vmul.f32 %v243, 1.442695
    %v245 = vpow.pop %v244
    %v246 = vadd.f32 %v245, 1.0
    %v247 = vrcp.pop %v246
    %v248 = vmul.f32 %v246, %v247
    %v249 = vsub.f32 1.0, %v248
    %v250 = vmul.f32 %v247, %v249
    %v251 = vadd.f32 %v247, %v250
    %vm252 = vweird.f32 %v246
    %vm253 = vweird.f32 %v247
    %vm254 = vmor %vm252, %vm253
    %v255 = vsel %vm254, %v247, %v251
    %v256 = vand.u32 2147483647, %v246
    %vm257 = vcmp.eq.f32.partialorder %v256, 8.507059e+37
    %v258 = vand.u32 %v246, 2147483648
    %v259 = vor.u32 1.1754944e-38, %v258
    %v260 = vsel %vm257, %v259, %v255
    %v261 = vmul.f32 1.0, %v260
    %v262 = vtanh.pop %v242
    %v263 = vmul.f32 %v261, 0.0
    %265 = vrot.lane.b32.xlu0 %v262, 64
    %v266 = vpop.permute.xlu0 %265
    %v268 = vmul.f32 %v261, %v266
    %270 = vrot.lane.b32.xlu0 %v268, 32
    %v271 = vpop.permute.xlu0 %270
    %v273 = vadd.f32 %v263, %v271
    %v274 = vtanh.pop %v273
    %276 = vrot.lane.b32.xlu0 %v274, 64
    %v277 = vpop.permute.xlu0 %276
    %v279 = vmul.f32 %v261, %v277
    %281 = vrot.lane.b32.xlu0 %v279, 32
    %v282 = vpop.permute.xlu0 %281
    %v284 = vsel %vm218, %v282, 0.0
    %vm285 = vcmask 523264
    %v287 = vsel %vm285, %v284, 0
    %289 = vmatpush.msra.mxu0 0.0
    %290 = vmatpush.msra.mxu0 0.0
    %291 = vmatpush.msra.mxu0 0.0
    %292 = vmatpush.msra.mxu0 0.0
    %293 = vmatpush.msra.mxu0 0.0
    %294 = vmatpush.msra.mxu0 0.0
    %295 = vmatpush.msra.mxu0 0.0
    %296 = vmatpush.msra.mxu0 0.0
    %297 = vmatpush.msra.mxu0 %v208
    %298 = vmatpush.msra.mxu0 %v207
    %299 = vmatpush.msra.mxu0 %v206
    %300 = vmatpush.msra.mxu0 %v205
    %301 = vmatpush.msra.mxu0 %v204
    %302 = vmatpush.msra.mxu0 %v203
    %303 = vmatpush.msra.mxu0 %v202
    %304 = vmatpush.msra.mxu0 %v201
    %305 = vmatmul.f32.gmra.mxu0 %v287
    %v306 = vpop.f32.mrf.mxu0
    %v307 = vadd.f32 %v215, %v306
    %308 = vdwg.mxu0
    %v309 = vxor.u32 %v307, 2147483648
    %v310 = vmul.f32 %v309, 1.442695
    %v311 = vpow.pop %v310
    %v312 = vadd.f32 %v311, 1.0
    %v313 = vrcp.pop %v312
    %v314 = vmul.f32 %v312, %v313
    %v315 = vsub.f32 1.0, %v314
    %v316 = vmul.f32 %v313, %v315
    %v317 = vadd.f32 %v313, %v316
    %vm318 = vweird.f32 %v312
    %vm319 = vweird.f32 %v313
    %vm320 = vmor %vm318, %vm319
    %v321 = vsel %vm320, %v313, %v317
    %v322 = vand.u32 2147483647, %v312
    %vm323 = vcmp.eq.f32.partialorder %v322, 8.507059e+37
    %v324 = vand.u32 %v312, 2147483648
    %v325 = vor.u32 1.1754944e-38, %v324
    %v326 = vsel %vm323, %v325, %v321
    %v327 = vmul.f32 1.0, %v326
    %v328 = vtanh.pop %v307
    %v329 = vmul.f32 %v327, 0.0
    %331 = vrot.lane.b32.xlu0 %v328, 64
    %v332 = vpop.permute.xlu0 %331
    %v334 = vmul.f32 %v327, %v332
    %336 = vrot.lane.b32.xlu0 %v334, 32
    %v337 = vpop.permute.xlu0 %336
    %v339 = vadd.f32 %v329, %v337
    %v340 = vtanh.pop %v339
    %342 = vrot.lane.b32.xlu0 %v340, 64
    %v343 = vpop.permute.xlu0 %342
    %v345 = vmul.f32 %v327, %v343
    %v346 = vadd.f32 %v175, %v211
    %v347 = vsel %vm218, %v282, 0
    %349 = vmatpush.msra.mxu0 0.0
    %350 = vmatpush.msra.mxu0 0.0
    %351 = vmatpush.msra.mxu0 0.0
    %352 = vmatpush.msra.mxu0 0.0
    %353 = vmatpush.msra.mxu0 0.0
    %354 = vmatpush.msra.mxu0 0.0
    %355 = vmatpush.msra.mxu0 0.0
    %356 = vmatpush.msra.mxu0 0.0
    %357 = vmatpush.msra.mxu0 0.0
    %358 = vmatpush.msra.mxu0 0.0
    %359 = vmatpush.msra.mxu0 0.0
    %360 = vmatpush.msra.mxu0 0.0
    %361 = vmatpush.msra.mxu0 %v200
    %362 = vmatpush.msra.mxu0 %v199
    %363 = vmatpush.msra.mxu0 %v198
    %364 = vmatpush.msra.mxu0 %v197
    %365 = vmatmul.f32.gmra.mxu0 %v347
    %v366 = vpop.f32.mrf.mxu0
    %v367 = vadd.f32 0.0, %v366
    %368 = vdwg.mxu0
    %v369 = vadd.f32 %v346, %v367
    %v370 = vxor.u32 %v369, 2147483648
    %v371 = vmul.f32 %v370, 1.442695
    %v372 = vpow.pop %v371
    %v373 = vadd.f32 %v372, 1.0
    %v374 = vrcp.pop %v373
    %v375 = vmul.f32 %v373, %v374
    %v376 = vsub.f32 1.0, %v375
    %v377 = vmul.f32 %v374, %v376
    %v378 = vadd.f32 %v374, %v377
    %vm379 = vweird.f32 %v373
    %vm380 = vweird.f32 %v374
    %vm381 = vmor %vm379, %vm380
    %v382 = vsel %vm381, %v374, %v378
    %v383 = vand.u32 2147483647, %v373
    %vm384 = vcmp.eq.f32.partialorder %v383, 8.507059e+37
    %v385 = vand.u32 %v373, 2147483648
    %v386 = vor.u32 1.1754944e-38, %v385
    %v387 = vsel %vm384, %v386, %v382
    %v388 = vmul.f32 1.0, %v387
    %v389 = vtanh.pop %v369
    %v390 = vmul.f32 %v388, %v273
    %392 = vrot.lane.b32.xlu0 %v389, 64
    %v393 = vpop.permute.xlu0 %392
    %v395 = vmul.f32 %v388, %v393
    %397 = vrot.lane.b32.xlu0 %v395, 32
    %v398 = vpop.permute.xlu0 %397
    %v400 = vadd.f32 %v390, %v398
    %v401 = vtanh.pop %v400
    %403 = vrot.lane.b32.xlu0 %v401, 64
    %v404 = vpop.permute.xlu0 %403
    %v406 = vmul.f32 %v388, %v404
    %408 = vrot.lane.b32.xlu0 %v406, 32
    %v409 = vpop.permute.xlu0 %408
    %412 = vrot.lane.b32.xlu0 %v345, 64
    %v413 = vpop.permute.xlu0 %412
    %v415 = vsel %vm218, %v409, %v413
    %v417 = vsel %vm285, %v415, 0
    %419 = vmatpush.msra.mxu0 0.0
    %420 = vmatpush.msra.mxu0 0.0
    %421 = vmatpush.msra.mxu0 0.0
    %422 = vmatpush.msra.mxu0 0.0
    %423 = vmatpush.msra.mxu0 0.0
    %424 = vmatpush.msra.mxu0 0.0
    %425 = vmatpush.msra.mxu0 0.0
    %426 = vmatpush.msra.mxu0 0.0
    %427 = vmatpush.msra.mxu0 %v208
    %428 = vmatpush.msra.mxu0 %v207
    %429 = vmatpush.msra.mxu0 %v206
    %430 = vmatpush.msra.mxu0 %v205
    %431 = vmatpush.msra.mxu0 %v204
    %432 = vmatpush.msra.mxu0 %v203
    %433 = vmatpush.msra.mxu0 %v202
    %434 = vmatpush.msra.mxu0 %v201
    %435 = vmatmul.f32.gmra.mxu0 %v417
    %v436 = vpop.f32.mrf.mxu0
    %v437 = vadd.f32 %v215, %v436
    %438 = vdwg.mxu0
    %v439 = vxor.u32 %v437, 2147483648
    %v440 = vmul.f32 %v439, 1.442695
    %v441 = vpow.pop %v440
    %v442 = vadd.f32 %v441, 1.0
    %v443 = vrcp.pop %v442
    %v444 = vmul.f32 %v442, %v443
    %v445 = vsub.f32 1.0, %v444
    %v446 = vmul.f32 %v443, %v445
    %v447 = vadd.f32 %v443, %v446
    %vm448 = vweird.f32 %v442
    %vm449 = vweird.f32 %v443
    %vm450 = vmor %vm448, %vm449
    %v451 = vsel %vm450, %v443, %v447
    %v452 = vand.u32 2147483647, %v442
    %vm453 = vcmp.eq.f32.partialorder %v452, 8.507059e+37
    %v454 = vand.u32 %v442, 2147483648
    %v455 = vor.u32 1.1754944e-38, %v454
    %v456 = vsel %vm453, %v455, %v451
    %v457 = vmul.f32 1.0, %v456
    %v458 = vtanh.pop %v437
    %v459 = vmul.f32 %v457, %v339
    %461 = vrot.lane.b32.xlu0 %v458, 64
    %v462 = vpop.permute.xlu0 %461
    %v464 = vmul.f32 %v457, %v462
    %466 = vrot.lane.b32.xlu0 %v464, 32
    %v467 = vpop.permute.xlu0 %466
    %v469 = vadd.f32 %v459, %v467
    %v470 = vtanh.pop %v469
    %472 = vrot.lane.b32.xlu0 %v470, 64
    %v473 = vpop.permute.xlu0 %472
    %v475 = vmul.f32 %v457, %v473
    %v476 = vadd.f32 %v195, %v211
    %v477 = vsel %vm218, %v409, 0
    %479 = vmatpush.msra.mxu0 0.0
    %480 = vmatpush.msra.mxu0 0.0
    %481 = vmatpush.msra.mxu0 0.0
    %482 = vmatpush.msra.mxu0 0.0
    %483 = vmatpush.msra.mxu0 0.0
    %484 = vmatpush.msra.mxu0 0.0
    %485 = vmatpush.msra.mxu0 0.0
    %486 = vmatpush.msra.mxu0 0.0
    %487 = vmatpush.msra.mxu0 0.0
    %488 = vmatpush.msra.mxu0 0.0
    %489 = vmatpush.msra.mxu0 0.0
    %490 = vmatpush.msra.mxu0 0.0
    %491 = vmatpush.msra.mxu0 %v200
    %492 = vmatpush.msra.mxu0 %v199
    %493 = vmatpush.msra.mxu0 %v198
    %494 = vmatpush.msra.mxu0 %v197
    %495 = vmatmul.f32.gmra.mxu0 %v477
    %v496 = vpop.f32.mrf.mxu0
    %v497 = vadd.f32 0.0, %v496
    %498 = vdwg.mxu0
    %v499 = vadd.f32 %v476, %v497
    %v500 = vxor.u32 %v499, 2147483648
    %v501 = vmul.f32 %v500, 1.442695
    %v502 = vpow.pop %v501
    %v503 = vadd.f32 %v502, 1.0
    %v504 = vrcp.pop %v503
    %v505 = vmul.f32 %v503, %v504
    %v506 = vsub.f32 1.0, %v505
    %v507 = vmul.f32 %v504, %v506
    %v508 = vadd.f32 %v504, %v507
    %vm509 = vweird.f32 %v503
    %vm510 = vweird.f32 %v504
    %vm511 = vmor %vm509, %vm510
    %v512 = vsel %vm511, %v504, %v508
    %v513 = vand.u32 2147483647, %v503
    %vm514 = vcmp.eq.f32.partialorder %v513, 8.507059e+37
    %v515 = vand.u32 %v503, 2147483648
    %v516 = vor.u32 1.1754944e-38, %v515
    %v517 = vsel %vm514, %v516, %v512
    %v518 = vmul.f32 1.0, %v517
    %v519 = vtanh.pop %v499
    %v520 = vmul.f32 %v518, %v400
    %522 = vrot.lane.b32.xlu0 %v519, 64
    %v523 = vpop.permute.xlu0 %522
    %v525 = vmul.f32 %v518, %v523
    %527 = vrot.lane.b32.xlu0 %v525, 32
    %v528 = vpop.permute.xlu0 %527
    %v530 = vadd.f32 %v520, %v528
    %v531 = vtanh.pop %v530
    %533 = vrot.lane.b32.xlu0 %v531, 64
    %v534 = vpop.permute.xlu0 %533
    %v536 = vmul.f32 %v518, %v534
    %538 = vrot.lane.b32.xlu0 %v536, 32
    %v539 = vpop.permute.xlu0 %538
    %542 = vrot.lane.b32.xlu0 %v475, 64
    %v543 = vpop.permute.xlu0 %542
    %v545 = vsel %vm218, %v539, %v543
    %v547 = vsel %vm285, %v545, 0
    %549 = vmatpush.msra.mxu0 0.0
    %550 = vmatpush.msra.mxu0 0.0
    %551 = vmatpush.msra.mxu0 0.0
    %552 = vmatpush.msra.mxu0 0.0
    %553 = vmatpush.msra.mxu0 0.0
    %554 = vmatpush.msra.mxu0 0.0
    %555 = vmatpush.msra.mxu0 0.0
    %556 = vmatpush.msra.mxu0 0.0
    %557 = vmatpush.msra.mxu0 %v208
    %558 = vmatpush.msra.mxu0 %v207
    %559 = vmatpush.msra.mxu0 %v206
    %560 = vmatpush.msra.mxu0 %v205
    %561 = vmatpush.msra.mxu0 %v204
    %562 = vmatpush.msra.mxu0 %v203
    %563 = vmatpush.msra.mxu0 %v202
    %564 = vmatpush.msra.mxu0 %v201
    %565 = vmatmul.f32.gmra.mxu0 %v547
    %v566 = vpop.f32.mrf.mxu0
    %v567 = vadd.f32 %v215, %v566
    %568 = vdwg.mxu0
    %v569 = vxor.u32 %v567, 2147483648
    %v570 = vmul.f32 %v569, 1.442695
    %v571 = vpow.pop %v570
    %v572 = vadd.f32 %v571, 1.0
    %v573 = vrcp.pop %v572
    %v574 = vmul.f32 %v572, %v573
    %v575 = vsub.f32 1.0, %v574
    %v576 = vmul.f32 %v573, %v575
    %v577 = vadd.f32 %v573, %v576
    %vm578 = vweird.f32 %v572
    %vm579 = vweird.f32 %v573
    %vm580 = vmor %vm578, %vm579
    %v581 = vsel %vm580, %v573, %v577
    %v582 = vand.u32 2147483647, %v572
    %vm583 = vcmp.eq.f32.partialorder %v582, 8.507059e+37
    %v584 = vand.u32 %v572, 2147483648
    %v585 = vor.u32 1.1754944e-38, %v584
    %v586 = vsel %vm583, %v585, %v581
    %v587 = vmul.f32 1.0, %v586
    %v588 = vtanh.pop %v567
    %v589 = vmul.f32 %v587, %v469
    %591 = vrot.lane.b32.xlu0 %v588, 64
    %v592 = vpop.permute.xlu0 %591
    %v594 = vmul.f32 %v587, %v592
    %596 = vrot.lane.b32.xlu0 %v594, 32
    %v597 = vpop.permute.xlu0 %596
    %v599 = vadd.f32 %v589, %v597
    %v600 = vtanh.pop %v599
    %602 = vrot.lane.b32.xlu0 %v600, 64
    %v603 = vpop.permute.xlu0 %602
    %v605 = vmul.f32 %v587, %v603
    %607 = vrot.lane.b32.xlu0 %v605, 32
    %v608 = vpop.permute.xlu0 %607
    %v610 = vsel %vm218, %v608, 0.0
    %611 = vadd.xlane.f32.xlu0 %v610
    %v612 = vpop.xlane.xlu0 %611
    %v613 = vrcp.pop 32.0
    %v614 = vmul.f32 32.0, %v613
    %v615 = vsub.f32 1.0, %v614
    %v616 = vmul.f32 %v613, %v615
    %v617 = vadd.f32 %v613, %v616
    %vm618 = vweird.f32 %v613
    %v619 = vsel %vm618, %v613, %v617
    %v620 = vmul.f32 %v612, %v619
    %v621 = vsub.f32 %v605, %v620
    %v622 = vmul.f32 %v621, %v621
    %624 = vrot.lane.b32.xlu0 %v622, 32
    %v625 = vpop.permute.xlu0 %624
    %v627 = vsel %vm218, %v625, 0.0
    %628 = vadd.xlane.f32.xlu0 %v627
    %v629 = vpop.xlane.xlu0 %628
    %v630 = vmul.f32 %v629, %v619
    %v631 = vadd.f32 %v630, 1e-05
    %v632 = vrsqrt.pop %v631
    %v633 = vmul.f32 %v632, %v631
    %v634 = vmul.f32 %v633, %v632
    %v635 = vmul.f32 0.5, %v634
    %v636 = vsub.f32 1.5, %v635
    %v637 = vmul.f32 %v632, %v636
    %vm638 = vweird.f32 %v631
    %vm639 = vweird.f32 %v632
    %vm640 = vmor %vm638, %vm639
    %v641 = vsel %vm640, %v632, %v637
    %v642 = vmul.f32 %v621, %v641
    %v643 = vld [vmem:[%s6] sm:$0x1]
    %v645 = vperm.slane %v643, 0
    %646 = vrot.lane.b32.xlu0 %v645, 96
    %v647 = vpop.permute.xlu0 %646
    %v649 = vmul.f32 %v642, %v647
    %v650 = vld [vmem:[%s7] sm:$0x1]
    %v652 = vperm.slane %v650, 0
    %653 = vrot.lane.b32.xlu0 %v652, 96
    %v654 = vpop.permute.xlu0 %653
    %v656 = vadd.f32 %v649, %v654
    %658 = vrot.lane.b32.xlu0 %v656, 32
    %v659 = vpop.permute.xlu0 %658
    %661 = vrot.lane.b32.xlu0 %v62, 32
    %v662 = vpop.permute.xlu0 %661
    %665 = vrot.lane.b32.xlu0 %v99, 36
    %v666 = vpop.permute.xlu0 %665
    %669 = vrot.lane.b32.xlu0 %v60, 40
    %v670 = vpop.permute.xlu0 %669
    %673 = vrot.lane.b32.xlu0 %v61, 44
    %v674 = vpop.permute.xlu0 %673
    %v676 = vsel %vm218, %v659, %v662
    %vm677 = vcmask 293888
    %v678 = vsel %vm677, %v676, %v666
    %vm679 = vcmask 326656
    %v680 = vsel %vm679, %v678, %v670
    %vm681 = vcmask 359424
    %v682 = vsel %vm681, %v680, %v674
    %v683 = vld [vmem:[%s8] sm:$0xff]
    %v684 = vld [vmem:[%s8 + $0x8] sm:$0xff]
    %v685 = vld [vmem:[%s8 + $0x10] sm:$0xff]
    %v686 = vld [vmem:[%s8 + $0x18] sm:$0xff]
    %v687 = vld [vmem:[%s8 + $0x20] sm:$0xff]
    %v688 = vld [vmem:[%s8 + $0x28] sm:$0xff]
    %v689 = vld [vmem:[%s8 + $0x30] sm:$0xff]
    %v690 = vld [vmem:[%s8 + $0x38] sm:$0xff]
    %v691 = vld [vmem:[%s8 + $0x40] sm:$0xff]
    %v692 = vld [vmem:[%s8 + $0x48] sm:$0xff]
    %v693 = vld [vmem:[%s8 + $0x50] sm:$0xff]
    %v694 = vld [vmem:[%s8 + $0x58] sm:$0xff]
    %v695 = vld [vmem:[%s8 + $0x60] sm:$0xff]
    %v696 = vld [vmem:[%s8 + $0x68] sm:$0xff]
    %v697 = vld [vmem:[%s8 + $0x70] sm:$0xff]
    %v698 = vld [vmem:[%s8 + $0x78] sm:$0xff]
    %v699 = vld [vmem:[%s8 + $0x80] sm:$0xff]
    %v700 = vld [vmem:[%s8 + $0x88] sm:$0xff]
    %v701 = vld [vmem:[%s8 + $0x90] sm:$0xff]
    %v702 = vld [vmem:[%s8 + $0x98] sm:$0xff]
    %v703 = vld [vmem:[%s8 + $0xa0] sm:$0xff]
    %v704 = vld [vmem:[%s8 + $0xa8] sm:$0xff]
    %v705 = vld [vmem:[%s8 + $0xb0] sm:$0xff]
    %v706 = vld [vmem:[%s8 + $0xb8] sm:$0xff]
    %v707 = vld [vmem:[%s9] sm:$0xf]
    %v709 = vperm.slane %v707, 0
    %v710 = vperm.slane %v707, 1
    %v711 = vperm.slane %v707, 2
    %v712 = vperm.slane %v707, 3
    %vm717 = vcmask 392192
    %v719 = vsel %vm717, %v682, 0
    %721 = vmatpush.msra.mxu0 0.0
    %722 = vmatpush.msra.mxu0 0.0
    %723 = vmatpush.msra.mxu0 0.0
    %724 = vmatpush.msra.mxu0 0.0
    %725 = vmatpush.msra.mxu0 0.0
    %726 = vmatpush.msra.mxu0 0.0
    %727 = vmatpush.msra.mxu0 0.0
    %728 = vmatpush.msra.mxu0 0.0
    %729 = vmatpush.msra.mxu0 0.0
    %730 = vmatpush.msra.mxu0 0.0
    %731 = vmatpush.msra.mxu0 %v703
    %732 = vmatpush.msra.mxu0 %v699
    %733 = vmatpush.msra.mxu0 %v695
    %734 = vmatpush.msra.mxu0 %v691
    %735 = vmatpush.msra.mxu0 %v687
    %736 = vmatpush.msra.mxu0 %v683
    %737 = vmatmul.f32.gmra.mxu0 %v719
    %v738 = vpop.f32.mrf.mxu0
    %v739 = vadd.f32 %v709, %v738
    %740 = vdwg.mxu0
    %741 = vmatpush.msra.mxu0 0.0
    %742 = vmatpush.msra.mxu0 0.0
    %743 = vmatpush.msra.mxu0 0.0
    %744 = vmatpush.msra.mxu0 0.0
    %745 = vmatpush.msra.mxu0 0.0
    %746 = vmatpush.msra.mxu0 0.0
    %747 = vmatpush.msra.mxu0 0.0
    %748 = vmatpush.msra.mxu0 0.0
    %749 = vmatpush.msra.mxu0 0.0
    %750 = vmatpush.msra.mxu0 0.0
    %751 = vmatpush.msra.mxu0 %v704
    %752 = vmatpush.msra.mxu0 %v700
    %753 = vmatpush.msra.mxu0 %v696
    %754 = vmatpush.msra.mxu0 %v692
    %755 = vmatpush.msra.mxu0 %v688
    %756 = vmatpush.msra.mxu0 %v684
    %757 = vmatmul.f32.gmra.mxu0 %v719
    %v758 = vpop.f32.mrf.mxu0
    %v759 = vadd.f32 %v710, %v758
    %760 = vdwg.mxu0
    %761 = vmatpush.msra.mxu0 0.0
    %762 = vmatpush.msra.mxu0 0.0
    %763 = vmatpush.msra.mxu0 0.0
    %764 = vmatpush.msra.mxu0 0.0
    %765 = vmatpush.msra.mxu0 0.0
    %766 = vmatpush.msra.mxu0 0.0
    %767 = vmatpush.msra.mxu0 0.0
    %768 = vmatpush.msra.mxu0 0.0
    %769 = vmatpush.msra.mxu0 0.0
    %770 = vmatpush.msra.mxu0 0.0
    %771 = vmatpush.msra.mxu0 %v705
    %772 = vmatpush.msra.mxu0 %v701
    %773 = vmatpush.msra.mxu0 %v697
    %774 = vmatpush.msra.mxu0 %v693
    %775 = vmatpush.msra.mxu0 %v689
    %776 = vmatpush.msra.mxu0 %v685
    %777 = vmatmul.f32.gmra.mxu0 %v719
    %v778 = vpop.f32.mrf.mxu0
    %v779 = vadd.f32 %v711, %v778
    %780 = vdwg.mxu0
    %781 = vmatpush.msra.mxu0 0.0
    %782 = vmatpush.msra.mxu0 0.0
    %783 = vmatpush.msra.mxu0 0.0
    %784 = vmatpush.msra.mxu0 0.0
    %785 = vmatpush.msra.mxu0 0.0
    %786 = vmatpush.msra.mxu0 0.0
    %787 = vmatpush.msra.mxu0 0.0
    %788 = vmatpush.msra.mxu0 0.0
    %789 = vmatpush.msra.mxu0 0.0
    %790 = vmatpush.msra.mxu0 0.0
    %791 = vmatpush.msra.mxu0 %v706
    %792 = vmatpush.msra.mxu0 %v702
    %793 = vmatpush.msra.mxu0 %v698
    %794 = vmatpush.msra.mxu0 %v694
    %795 = vmatpush.msra.mxu0 %v690
    %796 = vmatpush.msra.mxu0 %v686
    %797 = vmatmul.f32.gmra.mxu0 %v719
    %v798 = vpop.f32.mrf.mxu0
    %v799 = vadd.f32 %v712, %v798
    %800 = vdwg.mxu0
    %v801 = vmax.f32 %v739, 0.0
    %v802 = vmax.f32 %v759, 0.0
    %v803 = vmax.f32 %v779, 0.0
    %v804 = vmax.f32 %v799, 0.0
    %v805 = vld [vmem:[%s10] sm:$0xff]
    %v806 = vld [vmem:[%s10 + $0x8] sm:$0xff]
    %v807 = vld [vmem:[%s10 + $0x10] sm:$0xff]
    %v808 = vld [vmem:[%s10 + $0x18] sm:$0xff]
    %v809 = vld [vmem:[%s10 + $0x20] sm:$0xff]
    %v810 = vld [vmem:[%s10 + $0x28] sm:$0xff]
    %v811 = vld [vmem:[%s10 + $0x30] sm:$0xff]
    %v812 = vld [vmem:[%s10 + $0x38] sm:$0xff]
    %v813 = vld [vmem:[%s10 + $0x40] sm:$0xff]
    %v814 = vld [vmem:[%s10 + $0x48] sm:$0xff]
    %v815 = vld [vmem:[%s10 + $0x50] sm:$0xff]
    %v816 = vld [vmem:[%s10 + $0x58] sm:$0xff]
    %v817 = vld [vmem:[%s10 + $0x60] sm:$0xff]
    %v818 = vld [vmem:[%s10 + $0x68] sm:$0xff]
    %v819 = vld [vmem:[%s10 + $0x70] sm:$0xff]
    %v820 = vld [vmem:[%s10 + $0x78] sm:$0xff]
    %v821 = vld [vmem:[%s10 + $0x80] sm:$0xff]
    %v822 = vld [vmem:[%s10 + $0x88] sm:$0xff]
    %v823 = vld [vmem:[%s10 + $0x90] sm:$0xff]
    %v824 = vld [vmem:[%s10 + $0x98] sm:$0xff]
    %v825 = vld [vmem:[%s10 + $0xa0] sm:$0xff]
    %v826 = vld [vmem:[%s10 + $0xa8] sm:$0xff]
    %v827 = vld [vmem:[%s10 + $0xb0] sm:$0xff]
    %v828 = vld [vmem:[%s10 + $0xb8] sm:$0xff]
    %v829 = vld [vmem:[%s10 + $0xc0] sm:$0xff]
    %v830 = vld [vmem:[%s10 + $0xc8] sm:$0xff]
    %v831 = vld [vmem:[%s10 + $0xd0] sm:$0xff]
    %v832 = vld [vmem:[%s10 + $0xd8] sm:$0xff]
    %v833 = vld [vmem:[%s10 + $0xe0] sm:$0xff]
    %v834 = vld [vmem:[%s10 + $0xe8] sm:$0xff]
    %v835 = vld [vmem:[%s10 + $0xf0] sm:$0xff]
    %v836 = vld [vmem:[%s10 + $0xf8] sm:$0xff]
    %v837 = vld [vmem:[%s10 + $0x100] sm:$0xff]
    %v838 = vld [vmem:[%s10 + $0x108] sm:$0xff]
    %v839 = vld [vmem:[%s10 + $0x110] sm:$0xff]
    %v840 = vld [vmem:[%s10 + $0x118] sm:$0xff]
    %v841 = vld [vmem:[%s10 + $0x120] sm:$0xff]
    %v842 = vld [vmem:[%s10 + $0x128] sm:$0xff]
    %v843 = vld [vmem:[%s10 + $0x130] sm:$0xff]
    %v844 = vld [vmem:[%s10 + $0x138] sm:$0xff]
    %v845 = vld [vmem:[%s10 + $0x140] sm:$0xff]
    %v846 = vld [vmem:[%s10 + $0x148] sm:$0xff]
    %v847 = vld [vmem:[%s10 + $0x150] sm:$0xff]
    %v848 = vld [vmem:[%s10 + $0x158] sm:$0xff]
    %v849 = vld [vmem:[%s10 + $0x160] sm:$0xff]
    %v850 = vld [vmem:[%s10 + $0x168] sm:$0xff]
    %v851 = vld [vmem:[%s10 + $0x170] sm:$0xff]
    %v852 = vld [vmem:[%s10 + $0x178] sm:$0xff]
    %v853 = vld [vmem:[%s10 + $0x180] sm:$0xff]
    %v854 = vld [vmem:[%s10 + $0x188] sm:$0xff]
    %v855 = vld [vmem:[%s10 + $0x190] sm:$0xff]
    %v856 = vld [vmem:[%s10 + $0x198] sm:$0xff]
    %v857 = vld [vmem:[%s10 + $0x1a0] sm:$0xff]
    %v858 = vld [vmem:[%s10 + $0x1a8] sm:$0xff]
    %v859 = vld [vmem:[%s10 + $0x1b0] sm:$0xff]
    %v860 = vld [vmem:[%s10 + $0x1b8] sm:$0xff]
    %v861 = vld [vmem:[%s10 + $0x1c0] sm:$0xff]
    %v862 = vld [vmem:[%s10 + $0x1c8] sm:$0xff]
    %v863 = vld [vmem:[%s10 + $0x1d0] sm:$0xff]
    %v864 = vld [vmem:[%s10 + $0x1d8] sm:$0xff]
    %v865 = vld [vmem:[%s10 + $0x1e0] sm:$0xff]
    %v866 = vld [vmem:[%s10 + $0x1e8] sm:$0xff]
    %v867 = vld [vmem:[%s10 + $0x1f0] sm:$0xff]
    %v868 = vld [vmem:[%s10 + $0x1f8] sm:$0xff]
    %v869 = vld [vmem:[%s11] sm:$0x1]
    %v871 = vperm.slane %v869, 0
    %873 = vmatpush.msra.mxu0 %v820
    %874 = vmatpush.msra.mxu0 %v819
    %875 = vmatpush.msra.mxu0 %v818
    %876 = vmatpush.msra.mxu0 %v817
    %877 = vmatpush.msra.mxu0 %v816
    %878 = vmatpush.msra.mxu0 %v815
    %879 = vmatpush.msra.mxu0 %v814
    %880 = vmatpush.msra.mxu0 %v813
    %881 = vmatpush.msra.mxu0 %v812
    %882 = vmatpush.msra.mxu0 %v811
    %883 = vmatpush.msra.mxu0 %v810
    %884 = vmatpush.msra.mxu0 %v809
    %885 = vmatpush.msra.mxu0 %v808
    %886 = vmatpush.msra.mxu0 %v807
    %887 = vmatpush.msra.mxu0 %v806
    %888 = vmatpush.msra.mxu0 %v805
    %889 = vmatmul.f32.gmra.mxu0 %v801
    %v890 = vpop.f32.mrf.mxu0
    %v891 = vadd.f32 %v871, %v890
    %892 = vdwg.mxu0
    %893 = vmatpush.msra.mxu0 %v836
    %894 = vmatpush.msra.mxu0 %v835
    %895 = vmatpush.msra.mxu0 %v834
    %896 = vmatpush.msra.mxu0 %v833
    %897 = vmatpush.msra.mxu0 %v832
    %898 = vmatpush.msra.mxu0 %v831
    %899 = vmatpush.msra.mxu0 %v830
    %900 = vmatpush.msra.mxu0 %v829
    %901 = vmatpush.msra.mxu0 %v828
    %902 = vmatpush.msra.mxu0 %v827
    %903 = vmatpush.msra.mxu0 %v826
    %904 = vmatpush.msra.mxu0 %v825
    %905 = vmatpush.msra.mxu0 %v824
    %906 = vmatpush.msra.mxu0 %v823
    %907 = vmatpush.msra.mxu0 %v822
    %908 = vmatpush.msra.mxu0 %v821
    %909 = vmatmul.f32.gmra.mxu0 %v802
    %v910 = vpop.f32.mrf.mxu0
    %v911 = vadd.f32 %v891, %v910
    %912 = vdwg.mxu0
    %913 = vmatpush.msra.mxu0 %v852
    %914 = vmatpush.msra.mxu0 %v851
    %915 = vmatpush.msra.mxu0 %v850
    %916 = vmatpush.msra.mxu0 %v849
    %917 = vmatpush.msra.mxu0 %v848
    %918 = vmatpush.msra.mxu0 %v847
    %919 = vmatpush.msra.mxu0 %v846
    %920 = vmatpush.msra.mxu0 %v845
    %921 = vmatpush.msra.mxu0 %v844
    %922 = vmatpush.msra.mxu0 %v843
    %923 = vmatpush.msra.mxu0 %v842
    %924 = vmatpush.msra.mxu0 %v841
    %925 = vmatpush.msra.mxu0 %v840
    %926 = vmatpush.msra.mxu0 %v839
    %927 = vmatpush.msra.mxu0 %v838
    %928 = vmatpush.msra.mxu0 %v837
    %929 = vmatmul.f32.gmra.mxu0 %v803
    %v930 = vpop.f32.mrf.mxu0
    %v931 = vadd.f32 %v911, %v930
    %932 = vdwg.mxu0
    %933 = vmatpush.msra.mxu0 %v868
    %934 = vmatpush.msra.mxu0 %v867
    %935 = vmatpush.msra.mxu0 %v866
    %936 = vmatpush.msra.mxu0 %v865
    %937 = vmatpush.msra.mxu0 %v864
    %938 = vmatpush.msra.mxu0 %v863
    %939 = vmatpush.msra.mxu0 %v862
    %940 = vmatpush.msra.mxu0 %v861
    %941 = vmatpush.msra.mxu0 %v860
    %942 = vmatpush.msra.mxu0 %v859
    %943 = vmatpush.msra.mxu0 %v858
    %944 = vmatpush.msra.mxu0 %v857
    %945 = vmatpush.msra.mxu0 %v856
    %946 = vmatpush.msra.mxu0 %v855
    %947 = vmatpush.msra.mxu0 %v854
    %948 = vmatpush.msra.mxu0 %v853
    %949 = vmatmul.f32.gmra.mxu0 %v804
    %v950 = vpop.f32.mrf.mxu0
    %v951 = vadd.f32 %v931, %v950
    %952 = vdwg.mxu0
    %v953 = vmax.f32 %v951, 0.0
    %v954 = vld [vmem:[%s12] sm:$0xff]
    %v955 = vld [vmem:[%s12 + $0x8] sm:$0xff]
    %v956 = vld [vmem:[%s12 + $0x10] sm:$0xff]
    %v957 = vld [vmem:[%s12 + $0x18] sm:$0xff]
    %v958 = vld [vmem:[%s12 + $0x20] sm:$0xff]
    %v959 = vld [vmem:[%s12 + $0x28] sm:$0xff]
    %v960 = vld [vmem:[%s12 + $0x30] sm:$0xff]
    %v961 = vld [vmem:[%s12 + $0x38] sm:$0xff]
    %v962 = vld [vmem:[%s13] sm:$0x1]
    %v964 = vperm.slane %v962, 0
    %v967 = vsel %vm285, %v953, 0
    %969 = vmatpush.msra.mxu0 0.0
    %970 = vmatpush.msra.mxu0 0.0
    %971 = vmatpush.msra.mxu0 0.0
    %972 = vmatpush.msra.mxu0 0.0
    %973 = vmatpush.msra.mxu0 0.0
    %974 = vmatpush.msra.mxu0 0.0
    %975 = vmatpush.msra.mxu0 0.0
    %976 = vmatpush.msra.mxu0 0.0
    %977 = vmatpush.msra.mxu0 %v961
    %978 = vmatpush.msra.mxu0 %v960
    %979 = vmatpush.msra.mxu0 %v959
    %980 = vmatpush.msra.mxu0 %v958
    %981 = vmatpush.msra.mxu0 %v957
    %982 = vmatpush.msra.mxu0 %v956
    %983 = vmatpush.msra.mxu0 %v955
    %984 = vmatpush.msra.mxu0 %v954
    %985 = vmatmul.f32.gmra.mxu0 %v967
    %v986 = vpop.f32.mrf.mxu0
    %v987 = vadd.f32 %v964, %v986
    %988 = vdwg.mxu0
    %v989 = vmax.f32 %v987, 0.0
    %990 = vst [vmem:[#allocation2] sm:$0xff] %v989
    // Predicated region
    $region58: #{tpu_custom_call.1} parent=1 // pred_check
      _
    $region59: #{tpu_custom_call.1} parent=1 // pred_check_branch
      %992 = sbr.rel (0) target = $region61
    $region60: #{tpu_custom_call.1} parent=1 // pred_region
      %994 = vsyncadd [#allocation3], 0
      %s996 = sshll.u32 [#allocation2], 4
      %s997 = int_to_ptr.vmem [resolvable:$true] %s996
      %s998 = sshll.u32 %s14, 4
      %s999 = int_to_ptr.hbm [resolvable:$true] %s998
      %1001 = dma.vmem_to_hbm [thread:$0]  %s997, 128, %s999, [#allocation3]
    $region61: #{tpu_custom_call.1} parent=1 // pred_fallthru
      _
    // Predicated region
    $region62: #{tpu_custom_call.1} parent=1 // pred_check
      _
    $region63: #{tpu_custom_call.1} parent=1 // pred_check_branch
      %1003 = sbr.rel (0) target = $region65
    $region64: #{tpu_custom_call.1} parent=1 // pred_region
      %1005 = dma.done [#allocation3], 128
    $region65: #{tpu_custom_call.1} parent=1 // pred_fallthru
      _
    %1006 = vsyncpa [#allocation3], 1

</llo_original>
